<compile_context>
chip_gen: v7x
topology: tpu7x:2x2x1
jax: 0.10.0
libtpu: 0.0.40
codegen_flags: <defaults>
</compile_context>

<pallas_src>
import jax
import jax.numpy as jnp
from jax.experimental import pallas as pl
from jax.experimental.pallas import tpu as pltpu

# ----------------------------- config ---------------------------------------
B = 2            # batch
S = 8            # sequence length
D = 32           # model dim
NUM_HEADS = 4
HEAD_DIM = D // NUM_HEADS
FFN_HIDDEN = 4 * D   # gated FFN hidden size
EPS = 1e-6
BS = B * S


def _rmsnorm(x, gamma):
    # x: (rows, D), gamma: (1, D)
    ms = jnp.mean(x * x, axis=-1, keepdims=True)
    return x * jax.lax.rsqrt(ms + EPS) * gamma


def encoder_block_kernel(x_ref, g1_ref, wqkv_ref, wo_ref,
                         g2_ref, w13_ref, w2_ref, out_ref, attn_sc):
    x = x_ref[...]                   # (BS, D)
    g1 = g1_ref[...]                 # (1, D)
    g2 = g2_ref[...]                 # (1, D)

    # ---------------- attention branch ----------------
    xn = _rmsnorm(x, g1)                                                     # (BS, D)
    qkv = jnp.dot(xn, wqkv_ref[...], preferred_element_type=jnp.float32)    # (BS, 3D)

    scale = 1.0 / (HEAD_DIM ** 0.5)
    q = qkv[:, 0 * D:1 * D] * scale      # fold softmax scale into q once
    k = qkv[:, 1 * D:2 * D]
    v = qkv[:, 2 * D:3 * D]

    # split batch out of the row dim (sublane regrouping only; last dim kept)
    q3 = q.reshape(B, S, D)
    k3 = k.reshape(B, S, D)
    v3 = v.reshape(B, S, D)

    for h in range(NUM_HEADS):       # static loop over heads
        lo = h * HEAD_DIM
        qh = q3[:, :, lo:lo + HEAD_DIM]   # (B, S, Dh)
        kh = k3[:, :, lo:lo + HEAD_DIM]
        vh = v3[:, :, lo:lo + HEAD_DIM]

        # batched over B, contract head dim of both operands (no kh.T)
        s = jax.lax.dot_general(
            qh, kh, (((2,), (2,)), ((0,), (0,))),
            preferred_element_type=jnp.float32)                             # (B, S, S)

        # unmasked softmax over keys
        m = jnp.max(s, axis=-1, keepdims=True)
        p = jnp.exp(s - m)
        p = p * pl.reciprocal(jnp.sum(p, axis=-1, keepdims=True), approx=True)

        oh = jax.lax.dot_general(
            p, vh, (((2,), (1,)), ((0,), (0,))),
            preferred_element_type=jnp.float32)                             # (B, S, Dh)

        # write head output at a static offset (no concatenate)
        attn_sc[:, :, lo:lo + HEAD_DIM] = oh

    attn = attn_sc[...].reshape(BS, D)                                       # (BS, D)
    h1 = x + jnp.dot(attn, wo_ref[...], preferred_element_type=jnp.float32)  # residual 1

    # ---------------- gated FFN branch ----------------
    hn = _rmsnorm(h1, g2)                                                    # (BS, D)
    ab = jnp.dot(hn, w13_ref[...], preferred_element_type=jnp.float32)       # (BS, 2H) lane-dense
    a = ab[:, :FFN_HIDDEN]
    g = ab[:, FFN_HIDDEN:]
    gated = (a * jax.nn.sigmoid(a)) * g                                      # SiLU gate
    ffn = jnp.dot(gated, w2_ref[...], preferred_element_type=jnp.float32)    # (BS, D)

    out_ref[...] = h1 + ffn          # residual 2


def encoder_block(x, params):
    g1, wq, wk, wv, wo, g2, w1, w3, w2 = params

    # one-time weight packing (wrapper-side, not per-element pre-scaling)
    wqkv = jnp.concatenate([wq, wk, wv], axis=1)        # (D, 3D)
    w13 = jnp.concatenate([w1, w3], axis=1)             # (D, 2*FFN_HIDDEN)

    x2d = x.reshape(BS, D)

    full2d = lambda shape: pl.BlockSpec(shape, lambda i: (0, 0))

    out2d = pl.pallas_call(
        encoder_block_kernel,
        out_shape=jax.ShapeDtypeStruct((BS, D), jnp.float32),
        grid_spec=pltpu.PrefetchScalarGridSpec(
            num_scalar_prefetch=0,
            grid=(1,),                                   # single fused step
            in_specs=[
                full2d((BS, D)),                         # x
                full2d((1, D)),                          # attn_norm gamma
                full2d((D, 3 * D)),                      # fused wq|wk|wv
                full2d((D, D)),                          # wo
                full2d((1, D)),                          # ffn_norm gamma
                full2d((D, 2 * FFN_HIDDEN)),             # fused w1|w3
                full2d((FFN_HIDDEN, D)),                 # w2
            ],
            out_specs=full2d((BS, D)),
            scratch_shapes=[pltpu.VMEM((B, S, D), jnp.float32)],
        ),
        compiler_params=pltpu.CompilerParams(
            dimension_semantics=("arbitrary",)),
    )(x2d, g1, wqkv, wo, g2, w13, w2)

    return out2d.reshape(B, S, D)


# ----------------------------- reference (pure JAX) --------------------------
def encoder_block_ref(x, params):
    g1, wq, wk, wv, wo, g2, w1, w3, w2 = params

    def rmsnorm(t, g):
        return t * jax.lax.rsqrt(jnp.mean(t * t, -1, keepdims=True) + EPS) * g

    xn = rmsnorm(x, g1)
    q = xn @ wq
    k = xn @ wk
    v = xn @ wv
    qh = q.reshape(B, S, NUM_HEADS, HEAD_DIM).transpose(0, 2, 1, 3)
    kh = k.reshape(B, S, NUM_HEADS, HEAD_DIM).transpose(0, 2, 1, 3)
    vh = v.reshape(B, S, NUM_HEADS, HEAD_DIM).transpose(0, 2, 1, 3)
    s = jnp.einsum('bhqd,bhkd->bhqk', qh, kh) / (HEAD_DIM ** 0.5)
    p = jax.nn.softmax(s, axis=-1)
    o = jnp.einsum('bhqk,bhkd->bhqd', p, vh).transpose(0, 2, 1, 3).reshape(B, S, D)
    h = x + o @ wo
    hn = rmsnorm(h, g2)
    a = hn @ w1
    return h + ((a * jax.nn.sigmoid(a)) * (hn @ w3)) @ w2


# ----------------------------- main ------------------------------------------
if __name__ == "__main__":
    key = jax.random.PRNGKey(0)
    keys = jax.random.split(key, 9)

    x = jax.random.normal(keys[0], (B, S, D), dtype=jnp.float32)

    g1 = jnp.ones((1, D), dtype=jnp.float32)
    g2 = jnp.ones((1, D), dtype=jnp.float32)
    scale = 0.05
    wq = scale * jax.random.normal(keys[1], (D, D), dtype=jnp.float32)
    wk = scale * jax.random.normal(keys[2], (D, D), dtype=jnp.float32)
    wv = scale * jax.random.normal(keys[3], (D, D), dtype=jnp.float32)
    wo = scale * jax.random.normal(keys[4], (D, D), dtype=jnp.float32)
    w1 = scale * jax.random.normal(keys[5], (D, FFN_HIDDEN), dtype=jnp.float32)
    w3 = scale * jax.random.normal(keys[6], (D, FFN_HIDDEN), dtype=jnp.float32)
    w2 = scale * jax.random.normal(keys[7], (FFN_HIDDEN, D), dtype=jnp.float32)

    params = (g1, wq, wk, wv, wo, g2, w1, w3, w2)

    out = jax.block_until_ready(encoder_block(x, params))
    ref = jax.block_until_ready(encoder_block_ref(x, params))

    # slightly loosened tolerance to accommodate the EUP approx reciprocal
    assert jnp.allclose(out, ref, atol=1e-3, rtol=1e-3), "mismatch vs reference"

    print("KERNEL_OK")
</pallas_src>

<mosaic_0001>
module attributes {stable_mosaic.version = 11 : i64} {
  func.func @encoder_block_kernel(%arg0: i32, %arg1: memref<16x32xf32, #tpu.memory_space<vmem>>, %arg2: memref<1x32xf32, #tpu.memory_space<vmem>>, %arg3: memref<32x96xf32, #tpu.memory_space<vmem>>, %arg4: memref<32x32xf32, #tpu.memory_space<vmem>>, %arg5: memref<1x32xf32, #tpu.memory_space<vmem>>, %arg6: memref<32x256xf32, #tpu.memory_space<vmem>>, %arg7: memref<128x32xf32, #tpu.memory_space<vmem>>, %arg8: memref<16x32xf32, #tpu.memory_space<vmem>>, %arg9: memref<2x8x32xf32, #tpu.memory_space<vmem>>) attributes {dimension_semantics = [#tpu.dimension_semantics<arbitrary>], iteration_bounds = array<i64: 1>, scalar_prefetch = 0 : i64, scratch_operands = 1 : i64, tpu.core_type = #tpu.core_type<tc>, window_params = [{pipeline_mode = #tpu.pipeline_mode<synchronous>, transform_indices = @transform_0, window_bounds = array<i64: 16, 32>}, {pipeline_mode = #tpu.pipeline_mode<synchronous>, transform_indices = @transform_1, window_bounds = array<i64: 1, 32>}, {pipeline_mode = #tpu.pipeline_mode<synchronous>, transform_indices = @transform_2, window_bounds = array<i64: 32, 96>}, {pipeline_mode = #tpu.pipeline_mode<synchronous>, transform_indices = @transform_3, window_bounds = array<i64: 32, 32>}, {pipeline_mode = #tpu.pipeline_mode<synchronous>, transform_indices = @transform_4, window_bounds = array<i64: 1, 32>}, {pipeline_mode = #tpu.pipeline_mode<synchronous>, transform_indices = @transform_5, window_bounds = array<i64: 32, 256>}, {pipeline_mode = #tpu.pipeline_mode<synchronous>, transform_indices = @transform_6, window_bounds = array<i64: 128, 32>}, {pipeline_mode = #tpu.pipeline_mode<synchronous>, transform_indices = @transform_7, window_bounds = array<i64: 16, 32>}]} {
    %c0 = arith.constant 0 : index
    %c0_0 = arith.constant 0 : index
    %0 = vector.load %arg1[%c0, %c0_0] : memref<16x32xf32, #tpu.memory_space<vmem>>, vector<16x32xf32>
    %c0_1 = arith.constant 0 : index
    %c0_2 = arith.constant 0 : index
    %1 = vector.load %arg2[%c0_1, %c0_2] : memref<1x32xf32, #tpu.memory_space<vmem>>, vector<1x32xf32>
    %c0_3 = arith.constant 0 : index
    %c0_4 = arith.constant 0 : index
    %2 = vector.load %arg5[%c0_3, %c0_4] : memref<1x32xf32, #tpu.memory_space<vmem>>, vector<1x32xf32>
    %3 = arith.mulf %0, %0 : vector<16x32xf32>
    %cst = arith.constant dense<0.000000e+00> : vector<16xf32>
    %4 = vector.multi_reduction <add>, %3, %cst [1] : vector<16x32xf32> to vector<16xf32>
    %5 = vector.shape_cast %4 : vector<16xf32> to vector<16x1xf32>
    %cst_5 = arith.constant 3.200000e+01 : f32
    %6 = vector.broadcast %cst_5 : f32 to vector<16x1xf32>
    %7 = arith.divf %5, %6 : vector<16x1xf32>
    %cst_6 = arith.constant 9.99999997E-7 : f32
    %8 = vector.broadcast %cst_6 : f32 to vector<16x1xf32>
    %9 = arith.addf %7, %8 : vector<16x1xf32>
    %10 = math.rsqrt %9 : vector<16x1xf32>
    %11 = vector.broadcast %10 : vector<16x1xf32> to vector<16x32xf32>
    %12 = arith.mulf %0, %11 : vector<16x32xf32>
    %13 = vector.broadcast %1 : vector<1x32xf32> to vector<16x32xf32>
    %14 = arith.mulf %12, %13 : vector<16x32xf32>
    %c0_7 = arith.constant 0 : index
    %c0_8 = arith.constant 0 : index
    %15 = vector.load %arg3[%c0_7, %c0_8] : memref<32x96xf32, #tpu.memory_space<vmem>>, vector<32x96xf32>
    %cst_9 = arith.constant dense<0.000000e+00> : vector<16x96xf32>
    %16 = tpu.matmul %14, %15, %cst_9 {dimension_numbers = #tpu.dot_dimension_numbers<[1], [0], [0], [1], [0, 0, 1, 1], [], []>} : vector<16x32xf32>, vector<32x96xf32>, vector<16x96xf32> -> vector<16x96xf32>
    %17 = vector.extract_strided_slice %16 {offsets = [0, 0], sizes = [16, 32], strides = [1, 1]} : vector<16x96xf32> to vector<16x32xf32>
    %cst_10 = arith.constant 0.353553385 : f32
    %18 = vector.broadcast %cst_10 : f32 to vector<16x32xf32>
    %19 = arith.mulf %17, %18 : vector<16x32xf32>
    %20 = vector.extract_strided_slice %16 {offsets = [0, 32], sizes = [16, 32], strides = [1, 1]} : vector<16x96xf32> to vector<16x32xf32>
    %21 = vector.extract_strided_slice %16 {offsets = [0, 64], sizes = [16, 32], strides = [1, 1]} : vector<16x96xf32> to vector<16x32xf32>
    %22 = vector.shape_cast %19 : vector<16x32xf32> to vector<2x8x32xf32>
    %23 = vector.shape_cast %20 : vector<16x32xf32> to vector<2x8x32xf32>
    %24 = vector.shape_cast %21 : vector<16x32xf32> to vector<2x8x32xf32>
    %25 = vector.extract_strided_slice %22 {offsets = [0, 0, 0], sizes = [2, 8, 8], strides = [1, 1, 1]} : vector<2x8x32xf32> to vector<2x8x8xf32>
    %26 = vector.extract_strided_slice %23 {offsets = [0, 0, 0], sizes = [2, 8, 8], strides = [1, 1, 1]} : vector<2x8x32xf32> to vector<2x8x8xf32>
    %27 = vector.extract_strided_slice %24 {offsets = [0, 0, 0], sizes = [2, 8, 8], strides = [1, 1, 1]} : vector<2x8x32xf32> to vector<2x8x8xf32>
    %cst_11 = arith.constant dense<0.000000e+00> : vector<2x8x8xf32>
    %28 = tpu.matmul %25, %26, %cst_11 {dimension_numbers = #tpu.dot_dimension_numbers<[2], [2], [1], [1], [0, 0, 0, 1, 1, 1], [0], [0]>} : vector<2x8x8xf32>, vector<2x8x8xf32>, vector<2x8x8xf32> -> vector<2x8x8xf32>
    %cst_12 = arith.constant dense<0xFF800000> : vector<2x8xf32>
    %29 = vector.multi_reduction <maximumf>, %28, %cst_12 [2] : vector<2x8x8xf32> to vector<2x8xf32>
    %30 = vector.shape_cast %29 : vector<2x8xf32> to vector<2x8x1xf32>
    %31 = vector.broadcast %30 : vector<2x8x1xf32> to vector<2x8x8xf32>
    %32 = arith.subf %28, %31 : vector<2x8x8xf32>
    %33 = math.exp %32 : vector<2x8x8xf32>
    %cst_13 = arith.constant dense<0.000000e+00> : vector<2x8xf32>
    %34 = vector.multi_reduction <add>, %33, %cst_13 [2] : vector<2x8x8xf32> to vector<2x8xf32>
    %35 = vector.shape_cast %34 : vector<2x8xf32> to vector<2x8x1xf32>
    %36 = tpu.reciprocal %35 {approx = true} : vector<2x8x1xf32> -> vector<2x8x1xf32>
    %37 = vector.broadcast %36 : vector<2x8x1xf32> to vector<2x8x8xf32>
    %38 = arith.mulf %33, %37 : vector<2x8x8xf32>
    %cst_14 = arith.constant dense<0.000000e+00> : vector<2x8x8xf32>
    %39 = tpu.matmul %38, %27, %cst_14 {dimension_numbers = #tpu.dot_dimension_numbers<[2], [1], [1], [2], [0, 0, 0, 1, 1, 2], [0], [0]>} : vector<2x8x8xf32>, vector<2x8x8xf32>, vector<2x8x8xf32> -> vector<2x8x8xf32>
    %c0_15 = arith.constant 0 : index
    %c0_16 = arith.constant 0 : index
    %c0_17 = arith.constant 0 : index
    %40 = vector.load %arg9[%c0_15, %c0_16, %c0_17] : memref<2x8x32xf32, #tpu.memory_space<vmem>>, vector<2x8x8xf32>
    tpu.vector_store %arg9[%c0_15, %c0_16, %c0_17], %39 {strides = array<i32>} : memref<2x8x32xf32, #tpu.memory_space<vmem>>, vector<2x8x8xf32>,
    %41 = vector.extract_strided_slice %22 {offsets = [0, 0, 8], sizes = [2, 8, 8], strides = [1, 1, 1]} : vector<2x8x32xf32> to vector<2x8x8xf32>
    %42 = vector.extract_strided_slice %23 {offsets = [0, 0, 8], sizes = [2, 8, 8], strides = [1, 1, 1]} : vector<2x8x32xf32> to vector<2x8x8xf32>
    %43 = vector.extract_strided_slice %24 {offsets = [0, 0, 8], sizes = [2, 8, 8], strides = [1, 1, 1]} : vector<2x8x32xf32> to vector<2x8x8xf32>
    %cst_18 = arith.constant dense<0.000000e+00> : vector<2x8x8xf32>
    %44 = tpu.matmul %41, %42, %cst_18 {dimension_numbers = #tpu.dot_dimension_numbers<[2], [2], [1], [1], [0, 0, 0, 1, 1, 1], [0], [0]>} : vector<2x8x8xf32>, vector<2x8x8xf32>, vector<2x8x8xf32> -> vector<2x8x8xf32>
    %cst_19 = arith.constant dense<0xFF800000> : vector<2x8xf32>
    %45 = vector.multi_reduction <maximumf>, %44, %cst_19 [2] : vector<2x8x8xf32> to vector<2x8xf32>
    %46 = vector.shape_cast %45 : vector<2x8xf32> to vector<2x8x1xf32>
    %47 = vector.broadcast %46 : vector<2x8x1xf32> to vector<2x8x8xf32>
    %48 = arith.subf %44, %47 : vector<2x8x8xf32>
    %49 = math.exp %48 : vector<2x8x8xf32>
    %cst_20 = arith.constant dense<0.000000e+00> : vector<2x8xf32>
    %50 = vector.multi_reduction <add>, %49, %cst_20 [2] : vector<2x8x8xf32> to vector<2x8xf32>
    %51 = vector.shape_cast %50 : vector<2x8xf32> to vector<2x8x1xf32>
    %52 = tpu.reciprocal %51 {approx = true} : vector<2x8x1xf32> -> vector<2x8x1xf32>
    %53 = vector.broadcast %52 : vector<2x8x1xf32> to vector<2x8x8xf32>
    %54 = arith.mulf %49, %53 : vector<2x8x8xf32>
    %cst_21 = arith.constant dense<0.000000e+00> : vector<2x8x8xf32>
    %55 = tpu.matmul %54, %43, %cst_21 {dimension_numbers = #tpu.dot_dimension_numbers<[2], [1], [1], [2], [0, 0, 0, 1, 1, 2], [0], [0]>} : vector<2x8x8xf32>, vector<2x8x8xf32>, vector<2x8x8xf32> -> vector<2x8x8xf32>
    %c0_22 = arith.constant 0 : index
    %c0_23 = arith.constant 0 : index
    %c8 = arith.constant 8 : index
    %56 = vector.load %arg9[%c0_22, %c0_23, %c8] : memref<2x8x32xf32, #tpu.memory_space<vmem>>, vector<2x8x8xf32>
    tpu.vector_store %arg9[%c0_22, %c0_23, %c8], %55 {strides = array<i32>} : memref<2x8x32xf32, #tpu.memory_space<vmem>>, vector<2x8x8xf32>,
    %57 = vector.extract_strided_slice %22 {offsets = [0, 0, 16], sizes = [2, 8, 8], strides = [1, 1, 1]} : vector<2x8x32xf32> to vector<2x8x8xf32>
    %58 = vector.extract_strided_slice %23 {offsets = [0, 0, 16], sizes = [2, 8, 8], strides = [1, 1, 1]} : vector<2x8x32xf32> to vector<2x8x8xf32>
    %59 = vector.extract_strided_slice %24 {offsets = [0, 0, 16], sizes = [2, 8, 8], strides = [1, 1, 1]} : vector<2x8x32xf32> to vector<2x8x8xf32>
    %cst_24 = arith.constant dense<0.000000e+00> : vector<2x8x8xf32>
    %60 = tpu.matmul %57, %58, %cst_24 {dimension_numbers = #tpu.dot_dimension_numbers<[2], [2], [1], [1], [0, 0, 0, 1, 1, 1], [0], [0]>} : vector<2x8x8xf32>, vector<2x8x8xf32>, vector<2x8x8xf32> -> vector<2x8x8xf32>
    %cst_25 = arith.constant dense<0xFF800000> : vector<2x8xf32>
    %61 = vector.multi_reduction <maximumf>, %60, %cst_25 [2] : vector<2x8x8xf32> to vector<2x8xf32>
    %62 = vector.shape_cast %61 : vector<2x8xf32> to vector<2x8x1xf32>
    %63 = vector.broadcast %62 : vector<2x8x1xf32> to vector<2x8x8xf32>
    %64 = arith.subf %60, %63 : vector<2x8x8xf32>
    %65 = math.exp %64 : vector<2x8x8xf32>
    %cst_26 = arith.constant dense<0.000000e+00> : vector<2x8xf32>
    %66 = vector.multi_reduction <add>, %65, %cst_26 [2] : vector<2x8x8xf32> to vector<2x8xf32>
    %67 = vector.shape_cast %66 : vector<2x8xf32> to vector<2x8x1xf32>
    %68 = tpu.reciprocal %67 {approx = true} : vector<2x8x1xf32> -> vector<2x8x1xf32>
    %69 = vector.broadcast %68 : vector<2x8x1xf32> to vector<2x8x8xf32>
    %70 = arith.mulf %65, %69 : vector<2x8x8xf32>
    %cst_27 = arith.constant dense<0.000000e+00> : vector<2x8x8xf32>
    %71 = tpu.matmul %70, %59, %cst_27 {dimension_numbers = #tpu.dot_dimension_numbers<[2], [1], [1], [2], [0, 0, 0, 1, 1, 2], [0], [0]>} : vector<2x8x8xf32>, vector<2x8x8xf32>, vector<2x8x8xf32> -> vector<2x8x8xf32>
    %c0_28 = arith.constant 0 : index
    %c0_29 = arith.constant 0 : index
    %c16 = arith.constant 16 : index
    %72 = vector.load %arg9[%c0_28, %c0_29, %c16] : memref<2x8x32xf32, #tpu.memory_space<vmem>>, vector<2x8x8xf32>
    tpu.vector_store %arg9[%c0_28, %c0_29, %c16], %71 {strides = array<i32>} : memref<2x8x32xf32, #tpu.memory_space<vmem>>, vector<2x8x8xf32>,
    %73 = vector.extract_strided_slice %22 {offsets = [0, 0, 24], sizes = [2, 8, 8], strides = [1, 1, 1]} : vector<2x8x32xf32> to vector<2x8x8xf32>
    %74 = vector.extract_strided_slice %23 {offsets = [0, 0, 24], sizes = [2, 8, 8], strides = [1, 1, 1]} : vector<2x8x32xf32> to vector<2x8x8xf32>
    %75 = vector.extract_strided_slice %24 {offsets = [0, 0, 24], sizes = [2, 8, 8], strides = [1, 1, 1]} : vector<2x8x32xf32> to vector<2x8x8xf32>
    %cst_30 = arith.constant dense<0.000000e+00> : vector<2x8x8xf32>
    %76 = tpu.matmul %73, %74, %cst_30 {dimension_numbers = #tpu.dot_dimension_numbers<[2], [2], [1], [1], [0, 0, 0, 1, 1, 1], [0], [0]>} : vector<2x8x8xf32>, vector<2x8x8xf32>, vector<2x8x8xf32> -> vector<2x8x8xf32>
    %cst_31 = arith.constant dense<0xFF800000> : vector<2x8xf32>
    %77 = vector.multi_reduction <maximumf>, %76, %cst_31 [2] : vector<2x8x8xf32> to vector<2x8xf32>
    %78 = vector.shape_cast %77 : vector<2x8xf32> to vector<2x8x1xf32>
    %79 = vector.broadcast %78 : vector<2x8x1xf32> to vector<2x8x8xf32>
    %80 = arith.subf %76, %79 : vector<2x8x8xf32>
    %81 = math.exp %80 : vector<2x8x8xf32>
    %cst_32 = arith.constant dense<0.000000e+00> : vector<2x8xf32>
    %82 = vector.multi_reduction <add>, %81, %cst_32 [2] : vector<2x8x8xf32> to vector<2x8xf32>
    %83 = vector.shape_cast %82 : vector<2x8xf32> to vector<2x8x1xf32>
    %84 = tpu.reciprocal %83 {approx = true} : vector<2x8x1xf32> -> vector<2x8x1xf32>
    %85 = vector.broadcast %84 : vector<2x8x1xf32> to vector<2x8x8xf32>
    %86 = arith.mulf %81, %85 : vector<2x8x8xf32>
    %cst_33 = arith.constant dense<0.000000e+00> : vector<2x8x8xf32>
    %87 = tpu.matmul %86, %75, %cst_33 {dimension_numbers = #tpu.dot_dimension_numbers<[2], [1], [1], [2], [0, 0, 0, 1, 1, 2], [0], [0]>} : vector<2x8x8xf32>, vector<2x8x8xf32>, vector<2x8x8xf32> -> vector<2x8x8xf32>
    %c0_34 = arith.constant 0 : index
    %c0_35 = arith.constant 0 : index
    %c24 = arith.constant 24 : index
    %88 = vector.load %arg9[%c0_34, %c0_35, %c24] : memref<2x8x32xf32, #tpu.memory_space<vmem>>, vector<2x8x8xf32>
    tpu.vector_store %arg9[%c0_34, %c0_35, %c24], %87 {strides = array<i32>} : memref<2x8x32xf32, #tpu.memory_space<vmem>>, vector<2x8x8xf32>,
    %c0_36 = arith.constant 0 : index
    %c0_37 = arith.constant 0 : index
    %c0_38 = arith.constant 0 : index
    %89 = vector.load %arg9[%c0_36, %c0_37, %c0_38] : memref<2x8x32xf32, #tpu.memory_space<vmem>>, vector<2x8x32xf32>
    %90 = vector.shape_cast %89 : vector<2x8x32xf32> to vector<16x32xf32>
    %c0_39 = arith.constant 0 : index
    %c0_40 = arith.constant 0 : index
    %91 = vector.load %arg4[%c0_39, %c0_40] : memref<32x32xf32, #tpu.memory_space<vmem>>, vector<32x32xf32>
    %cst_41 = arith.constant dense<0.000000e+00> : vector<16x32xf32>
    %92 = tpu.matmul %90, %91, %cst_41 {dimension_numbers = #tpu.dot_dimension_numbers<[1], [0], [0], [1], [0, 0, 1, 1], [], []>} : vector<16x32xf32>, vector<32x32xf32>, vector<16x32xf32> -> vector<16x32xf32>
    %93 = arith.addf %0, %92 : vector<16x32xf32>
    %94 = arith.mulf %93, %93 : vector<16x32xf32>
    %cst_42 = arith.constant dense<0.000000e+00> : vector<16xf32>
    %95 = vector.multi_reduction <add>, %94, %cst_42 [1] : vector<16x32xf32> to vector<16xf32>
    %96 = vector.shape_cast %95 : vector<16xf32> to vector<16x1xf32>
    %cst_43 = arith.constant 3.200000e+01 : f32
    %97 = vector.broadcast %cst_43 : f32 to vector<16x1xf32>
    %98 = arith.divf %96, %97 : vector<16x1xf32>
    %cst_44 = arith.constant 9.99999997E-7 : f32
    %99 = vector.broadcast %cst_44 : f32 to vector<16x1xf32>
    %100 = arith.addf %98, %99 : vector<16x1xf32>
    %101 = math.rsqrt %100 : vector<16x1xf32>
    %102 = vector.broadcast %101 : vector<16x1xf32> to vector<16x32xf32>
    %103 = arith.mulf %93, %102 : vector<16x32xf32>
    %104 = vector.broadcast %2 : vector<1x32xf32> to vector<16x32xf32>
    %105 = arith.mulf %103, %104 : vector<16x32xf32>
    %c0_45 = arith.constant 0 : index
    %c0_46 = arith.constant 0 : index
    %106 = vector.load %arg6[%c0_45, %c0_46] : memref<32x256xf32, #tpu.memory_space<vmem>>, vector<32x256xf32>
    %cst_47 = arith.constant dense<0.000000e+00> : vector<16x256xf32>
    %107 = tpu.matmul %105, %106, %cst_47 {dimension_numbers = #tpu.dot_dimension_numbers<[1], [0], [0], [1], [0, 0, 1, 1], [], []>} : vector<16x32xf32>, vector<32x256xf32>, vector<16x256xf32> -> vector<16x256xf32>
    %108 = vector.extract_strided_slice %107 {offsets = [0, 0], sizes = [16, 128], strides = [1, 1]} : vector<16x256xf32> to vector<16x128xf32>
    %109 = vector.extract_strided_slice %107 {offsets = [0, 128], sizes = [16, 128], strides = [1, 1]} : vector<16x256xf32> to vector<16x128xf32>
    %110 = arith.negf %108 : vector<16x128xf32>
    %111 = math.exp %110 : vector<16x128xf32>
    %cst_48 = arith.constant 1.000000e+00 : f32
    %112 = vector.broadcast %cst_48 : f32 to vector<16x128xf32>
    %113 = arith.addf %112, %111 : vector<16x128xf32>
    %114 = arith.divf %112, %113 : vector<16x128xf32>
    %115 = arith.mulf %108, %114 : vector<16x128xf32>
    %116 = arith.mulf %115, %109 : vector<16x128xf32>
    %c0_49 = arith.constant 0 : index
    %c0_50 = arith.constant 0 : index
    %117 = vector.load %arg7[%c0_49, %c0_50] : memref<128x32xf32, #tpu.memory_space<vmem>>, vector<128x32xf32>
    %cst_51 = arith.constant dense<0.000000e+00> : vector<16x32xf32>
    %118 = tpu.matmul %116, %117, %cst_51 {dimension_numbers = #tpu.dot_dimension_numbers<[1], [0], [0], [1], [0, 0, 1, 1], [], []>} : vector<16x128xf32>, vector<128x32xf32>, vector<16x32xf32> -> vector<16x32xf32>
    %119 = arith.addf %93, %118 : vector<16x32xf32>
    %c0_52 = arith.constant 0 : index
    %c0_53 = arith.constant 0 : index
    %120 = vector.load %arg8[%c0_52, %c0_53] : memref<16x32xf32, #tpu.memory_space<vmem>>, vector<16x32xf32>
    tpu.vector_store %arg8[%c0_52, %c0_53], %119 {strides = array<i32>} : memref<16x32xf32, #tpu.memory_space<vmem>>, vector<16x32xf32>,
    return
  }
  func.func @transform_0(%arg0: i32) -> (i32, i32) {
    %c0_i32 = arith.constant 0 : i32
    %c0_i32_0 = arith.constant 0 : i32
    %c0_i32_1 = arith.constant 0 : i32
    return %c0_i32, %c0_i32_0 : i32, i32
  }
  func.func @transform_1(%arg0: i32) -> (i32, i32) {
    %c0_i32 = arith.constant 0 : i32
    %c0_i32_0 = arith.constant 0 : i32
    %c0_i32_1 = arith.constant 0 : i32
    return %c0_i32, %c0_i32_0 : i32, i32
  }
  func.func @transform_2(%arg0: i32) -> (i32, i32) {
    %c0_i32 = arith.constant 0 : i32
    %c0_i32_0 = arith.constant 0 : i32
    %c0_i32_1 = arith.constant 0 : i32
    return %c0_i32, %c0_i32_0 : i32, i32
  }
  func.func @transform_3(%arg0: i32) -> (i32, i32) {
    %c0_i32 = arith.constant 0 : i32
    %c0_i32_0 = arith.constant 0 : i32
    %c0_i32_1 = arith.constant 0 : i32
    return %c0_i32, %c0_i32_0 : i32, i32
  }
  func.func @transform_4(%arg0: i32) -> (i32, i32) {
    %c0_i32 = arith.constant 0 : i32
    %c0_i32_0 = arith.constant 0 : i32
    %c0_i32_1 = arith.constant 0 : i32
    return %c0_i32, %c0_i32_0 : i32, i32
  }
  func.func @transform_5(%arg0: i32) -> (i32, i32) {
    %c0_i32 = arith.constant 0 : i32
    %c0_i32_0 = arith.constant 0 : i32
    %c0_i32_1 = arith.constant 0 : i32
    return %c0_i32, %c0_i32_0 : i32, i32
  }
  func.func @transform_6(%arg0: i32) -> (i32, i32) {
    %c0_i32 = arith.constant 0 : i32
    %c0_i32_0 = arith.constant 0 : i32
    %c0_i32_1 = arith.constant 0 : i32
    return %c0_i32, %c0_i32_0 : i32, i32
  }
  func.func @transform_7(%arg0: i32) -> (i32, i32) {
    %c0_i32 = arith.constant 0 : i32
    %c0_i32_0 = arith.constant 0 : i32
    %c0_i32_1 = arith.constant 0 : i32
    return %c0_i32, %c0_i32_0 : i32, i32
  }
}

</mosaic_0001>

<llo_original>
// kernel: tpu_custom_call.1
$region0: #{tpu_custom_call.1}
  #allocation0 [shape = 'u32[]', space=smem, size = 0x4, offset = 0x4, fixed_abs, tag = 'smem constant byte address 0x4 - core index']
  #allocation1 [shape = 'u32[144,128]{1,0:T(1,128)}', space=vmem, size = 0x12000, scoped, tag = 'internal scratch']
  #allocation2 [shape = 'f32[2,8,32]{2,1,0:T(8,128)}', space=vmem, size = 0x2000, scoped, tag = 'scratch operand']
  %s0 = inlined_call_operand.vmem [shape: f32[16,32], index: 0, kind: input, shape index: {}]
  %s1 = inlined_call_operand.vmem [shape: f32[1,32], index: 1, kind: input, shape index: {}]
  %s2 = inlined_call_operand.vmem [shape: f32[32,96], index: 2, kind: input, shape index: {}]
  %s3 = inlined_call_operand.vmem [shape: f32[32,32], index: 3, kind: input, shape index: {}]
  %s4 = inlined_call_operand.vmem [shape: f32[1,32], index: 4, kind: input, shape index: {}]
  %s5 = inlined_call_operand.vmem [shape: f32[32,256], index: 5, kind: input, shape index: {}]
  %s6 = inlined_call_operand.vmem [shape: f32[128,32], index: 6, kind: input, shape index: {}]
  %s7 = inlined_call_operand.hbm [shape: f32[16,32], index: 7, kind: output, shape index: {}]
  %s8 = sld [smem:[#allocation0]]
  $region38: #{tpu_custom_call.1} parent=0
    _
  %s10 = ssub.s32 1, %s8
  %s11 = scalar_select 0, %s10, %s8
  $region1: #{tpu_custom_call.1} parent=0
    #allocation3 [shape = 'u8[8192]{0}', space=vmem, size = 0x2000, scoped, tag = 'output window, operand 0, single buffered']
    #allocation4 [shape = 's32[1]{0}', space=sflag, size = 0x4, scoped, tag = 'scoped memory for tpu_custom_call.1']
    %12 = vsyncpa [#allocation4], 0
    // Predicated region
    $region2: #{tpu_custom_call.1} parent=1 // pred_check
      _
    $region3: #{tpu_custom_call.1} parent=1 // pred_check_branch
      %14 = sbr.rel (0) target = $region5
    $region4: #{tpu_custom_call.1} parent=1 // pred_region
      _
    $region5: #{tpu_custom_call.1} parent=1 // pred_fallthru
      _
    // Predicated region
    $region6: #{tpu_custom_call.1} parent=1 // pred_check
      _
    $region7: #{tpu_custom_call.1} parent=1 // pred_check_branch
      %16 = sbr.rel (0) target = $region9
    $region8: #{tpu_custom_call.1} parent=1 // pred_region
      _
    $region9: #{tpu_custom_call.1} parent=1 // pred_fallthru
      _
    // Predicated region
    $region10: #{tpu_custom_call.1} parent=1 // pred_check
      _
    $region11: #{tpu_custom_call.1} parent=1 // pred_check_branch
      %18 = sbr.rel (0) target = $region13
    $region12: #{tpu_custom_call.1} parent=1 // pred_region
      _
    $region13: #{tpu_custom_call.1} parent=1 // pred_fallthru
      _
    // Predicated region
    $region14: #{tpu_custom_call.1} parent=1 // pred_check
      _
    $region15: #{tpu_custom_call.1} parent=1 // pred_check_branch
      %20 = sbr.rel (0) target = $region17
    $region16: #{tpu_custom_call.1} parent=1 // pred_region
      _
    $region17: #{tpu_custom_call.1} parent=1 // pred_fallthru
      _
    // Predicated region
    $region18: #{tpu_custom_call.1} parent=1 // pred_check
      _
    $region19: #{tpu_custom_call.1} parent=1 // pred_check_branch
      %22 = sbr.rel (0) target = $region21
    $region20: #{tpu_custom_call.1} parent=1 // pred_region
      _
    $region21: #{tpu_custom_call.1} parent=1 // pred_fallthru
      _
    // Predicated region
    $region22: #{tpu_custom_call.1} parent=1 // pred_check
      _
    $region23: #{tpu_custom_call.1} parent=1 // pred_check_branch
      %24 = sbr.rel (0) target = $region25
    $region24: #{tpu_custom_call.1} parent=1 // pred_region
      _
    $region25: #{tpu_custom_call.1} parent=1 // pred_fallthru
      _
    // Predicated region
    $region26: #{tpu_custom_call.1} parent=1 // pred_check
      _
    $region27: #{tpu_custom_call.1} parent=1 // pred_check_branch
      %26 = sbr.rel (0) target = $region29
    $region28: #{tpu_custom_call.1} parent=1 // pred_region
      _
    $region29: #{tpu_custom_call.1} parent=1 // pred_fallthru
      _
    %v27 = vld [vmem:[%s0] sm:$0xff]
    %v28 = vld [vmem:[%s0 + $0x8] sm:$0xff]
    %v29 = vld [vmem:[%s1] sm:$0x1]
    %v30 = vld [vmem:[%s4] sm:$0x1]
    %v31 = vmul.f32 %v27, %v27
    %v32 = vmul.f32 %v28, %v28
    %vm33 = vcmask 261120
    %v34 = vsel %vm33, %v31, 0.0
    %35 = vadd.xlane.f32.xlu0 %v34
    %v36 = vpop.xlane.xlu0 %35
    %v37 = vsel %vm33, %v32, 0.0
    %38 = vadd.xlane.f32.xlu0 %v37
    %v39 = vpop.xlane.xlu0 %38
    %v40 = vrcp.pop 32.0
    %v41 = vmul.f32 %v36, %v40
    %v42 = vmul.f32 %v39, %v40
    %v43 = vadd.f32 %v41, 1e-06
    %v44 = vadd.f32 %v42, 1e-06
    %v45 = vrsqrt.pop %v43
    %v46 = vrsqrt.pop %v44
    %v47 = vmul.f32 %v27, %v45
    %v48 = vmul.f32 %v28, %v46
    %v50 = vlaneseq
    %v51 = vshrl.u32 %v50, 7
    %v52 = vsub.s32 0, %v51
    %v53 = vrot.slane %v29, %v52
    %v55 = vmul.f32 %v47, %v53
    %v56 = vmul.f32 %v48, %v53
    %v57 = vld [vmem:[%s2] sm:$0xff]
    %v58 = vld [vmem:[%s2 + $0x8] sm:$0xff]
    %v59 = vld [vmem:[%s2 + $0x10] sm:$0xff]
    %v60 = vld [vmem:[%s2 + $0x18] sm:$0xff]
    %v62 = vsel %vm33, %v55, 0
    %v65 = vsel %vm33, %v56, 0
    %67 = vmatprep.subr.mxu0 0.0
    %68 = vmatpush1.msra.mxu0 %v57
    %69 = vmatprep.subr.mxu0 0.0
    %70 = vmatpush1.msra.mxu0 %v58
    %71 = vmatprep.subr.mxu0 0.0
    %72 = vmatpush1.msra.mxu0 %v59
    %73 = vmatprep.subr.mxu0 0.0
    %74 = vmatpush1.msra.mxu0 %v60
    %75 = vmatprep.subr.mxu0 0.0
    %76 = vmatpush1.msra.mxu0 0.0
    %77 = vmatprep.subr.mxu0 0.0
    %78 = vmatpush1.msra.mxu0 0.0
    %79 = vmatprep.subr.mxu0 0.0
    %80 = vmatpush1.msra.mxu0 0.0
    %81 = vmatprep.subr.mxu0 0.0
    %82 = vmatpush1.msra.mxu0 0.0
    %83 = vmatprep.subr.mxu0 0.0
    %84 = vmatpush1.msra.mxu0 0.0
    %85 = vmatprep.subr.mxu0 0.0
    %86 = vmatpush1.msra.mxu0 0.0
    %87 = vmatprep.subr.mxu0 0.0
    %88 = vmatpush1.msra.mxu0 0.0
    %89 = vmatprep.subr.mxu0 0.0
    %90 = vmatpush1.msra.mxu0 0.0
    %91 = vmatprep.subr.mxu0 0.0
    %92 = vmatpush1.msra.mxu0 0.0
    %93 = vmatprep.subr.mxu0 0.0
    %94 = vmatpush1.msra.mxu0 0.0
    %95 = vmatprep.subr.mxu0 0.0
    %96 = vmatpush1.msra.mxu0 0.0
    %97 = vmatprep.subr.mxu0 0.0
    %98 = vmatpush1.msra.mxu0 0.0
    %99 = vmatprep.subr.mxu0 0.0
    %100 = vmatpush1.msra.mxu0 0.0
    %101 = vmatprep.subr.mxu0 0.0
    %102 = vmatpush1.msra.mxu0 0.0
    %103 = vmatprep.subr.mxu0 0.0
    %104 = vmatpush1.msra.mxu0 0.0
    %105 = vmatprep.subr.mxu0 0.0
    %106 = vmatpush1.msra.mxu0 0.0
    %107 = vmatprep.subr.mxu0 0.0
    %108 = vmatpush1.msra.mxu0 0.0
    %109 = vmatprep.subr.mxu0 0.0
    %110 = vmatpush1.msra.mxu0 0.0
    %111 = vmatprep.subr.mxu0 0.0
    %112 = vmatpush1.msra.mxu0 0.0
    %113 = vmatprep.subr.mxu0 0.0
    %114 = vmatpush1.msra.mxu0 0.0
    %115 = vmatprep.subr.mxu0 0.0
    %116 = vmatpush1.msra.mxu0 0.0
    %117 = vmatprep.subr.mxu0 0.0
    %118 = vmatpush1.msra.mxu0 0.0
    %119 = vmatprep.subr.mxu0 0.0
    %120 = vmatpush1.msra.mxu0 0.0
    %121 = vmatprep.subr.mxu0 0.0
    %122 = vmatpush1.msra.mxu0 0.0
    %123 = vmatprep.subr.mxu0 0.0
    %124 = vmatpush1.msra.mxu0 0.0
    %125 = vmatprep.subr.mxu0 0.0
    %126 = vmatpush1.msra.mxu0 0.0
    %127 = vmatprep.subr.mxu0 0.0
    %128 = vmatpush1.msra.mxu0 0.0
    %129 = vmatprep.subr.mxu0 0.0
    %130 = vmatpush1.msra.mxu0 0.0
    %131 = vmatprep.mubr.f32.mxu0 0.0
    %132 = vmatmul.mubr.f32.gmra.mrb[0].mxu0 %v62
    %v133 = vpop.f32.mrb[0].mxu0
    %v134 = vadd.f32 0.0, %v133
    %v135 = vpop.f32.mrb[0].mxu0
    %136 = vmatprep.mubr.f32.mxu0 0.0
    %137 = vmatmul.mubr.f32.gmra.mrb[0].mxu0 %v65
    %v138 = vpop.f32.mrb[0].mxu0
    %v139 = vadd.f32 0.0, %v138
    %v140 = vpop.f32.mrb[0].mxu0
    %141 = vdwg.mxu0
    %v142 = vmul.f32 %v134, 0.35355338
    %v143 = vmul.f32 %v139, 0.35355338
    %145 = vrot.lane.b32.xlu0 %v134, 96
    %v146 = vpop.permute.xlu0 %145
    %vm147 = vcmask 64512
    %v149 = vsel %vm147, %v142, 0
    %v151 = vsel %vm147, %v146, 0
    %153 = vmatprep.subr.mxu0 0.0
    %154 = vmatpush1.xpose.msra.mxu0 %v151
    %155 = vmatprep.subr.mxu0 0.0
    %156 = vmatpush1.xpose.msra.mxu0 0.0
    %157 = vmatprep.subr.mxu0 0.0
    %158 = vmatpush1.xpose.msra.mxu0 0.0
    %159 = vmatprep.subr.mxu0 0.0
    %160 = vmatpush1.xpose.msra.mxu0 0.0
    %161 = vmatprep.subr.mxu0 0.0
    %162 = vmatpush1.xpose.msra.mxu0 0.0
    %163 = vmatprep.subr.mxu0 0.0
    %164 = vmatpush1.xpose.msra.mxu0 0.0
    %165 = vmatprep.subr.mxu0 0.0
    %166 = vmatpush1.xpose.msra.mxu0 0.0
    %167 = vmatprep.subr.mxu0 0.0
    %168 = vmatpush1.xpose.msra.mxu0 0.0
    %169 = vmatprep.subr.mxu0 0.0
    %170 = vmatpush1.xpose.msra.mxu0 0.0
    %171 = vmatprep.subr.mxu0 0.0
    %172 = vmatpush1.xpose.msra.mxu0 0.0
    %173 = vmatprep.subr.mxu0 0.0
    %174 = vmatpush1.xpose.msra.mxu0 0.0
    %175 = vmatprep.subr.mxu0 0.0
    %176 = vmatpush1.xpose.msra.mxu0 0.0
    %177 = vmatprep.subr.mxu0 0.0
    %178 = vmatpush1.xpose.msra.mxu0 0.0
    %179 = vmatprep.subr.mxu0 0.0
    %180 = vmatpush1.xpose.msra.mxu0 0.0
    %181 = vmatprep.subr.mxu0 0.0
    %182 = vmatpush1.xpose.msra.mxu0 0.0
    %183 = vmatprep.subr.mxu0 0.0
    %184 = vmatpush1.xpose.msra.mxu0 0.0
    %185 = vmatprep.subr.mxu0 0.0
    %186 = vmatpush1.xpose.msra.mxu0 0.0
    %187 = vmatprep.subr.mxu0 0.0
    %188 = vmatpush1.xpose.msra.mxu0 0.0
    %189 = vmatprep.subr.mxu0 0.0
    %190 = vmatpush1.xpose.msra.mxu0 0.0
    %191 = vmatprep.subr.mxu0 0.0
    %192 = vmatpush1.xpose.msra.mxu0 0.0
    %193 = vmatprep.subr.mxu0 0.0
    %194 = vmatpush1.xpose.msra.mxu0 0.0
    %195 = vmatprep.subr.mxu0 0.0
    %196 = vmatpush1.xpose.msra.mxu0 0.0
    %197 = vmatprep.subr.mxu0 0.0
    %198 = vmatpush1.xpose.msra.mxu0 0.0
    %199 = vmatprep.subr.mxu0 0.0
    %200 = vmatpush1.xpose.msra.mxu0 0.0
    %201 = vmatprep.subr.mxu0 0.0
    %202 = vmatpush1.xpose.msra.mxu0 0.0
    %203 = vmatprep.subr.mxu0 0.0
    %204 = vmatpush1.xpose.msra.mxu0 0.0
    %205 = vmatprep.subr.mxu0 0.0
    %206 = vmatpush1.xpose.msra.mxu0 0.0
    %207 = vmatprep.subr.mxu0 0.0
    %208 = vmatpush1.xpose.msra.mxu0 0.0
    %209 = vmatprep.subr.mxu0 0.0
    %210 = vmatpush1.xpose.msra.mxu0 0.0
    %211 = vmatprep.subr.mxu0 0.0
    %212 = vmatpush1.xpose.msra.mxu0 0.0
    %213 = vmatprep.subr.mxu0 0.0
    %214 = vmatpush1.xpose.msra.mxu0 0.0
    %215 = vmatprep.subr.mxu0 0.0
    %216 = vmatpush1.xpose.msra.mxu0 0.0
    %217 = vmatprep.mubr.f32.mxu0 0.0
    %218 = vmatmul.mubr.f32.gmra.mrb[0].mxu0 %v149
    %v219 = vpop.f32.mrb[0].mxu0
    %v220 = vadd.f32 0.0, %v219
    %v221 = vpop.f32.mrb[0].mxu0
    %222 = vdwg.mxu0
    %224 = vrot.lane.b32.xlu0 %v139, 96
    %v225 = vpop.permute.xlu0 %224
    %v227 = vsel %vm147, %v143, 0
    %v229 = vsel %vm147, %v225, 0
    %231 = vmatprep.subr.mxu0 0.0
    %232 = vmatpush1.xpose.msra.mxu0 %v229
    %233 = vmatprep.subr.mxu0 0.0
    %234 = vmatpush1.xpose.msra.mxu0 0.0
    %235 = vmatprep.subr.mxu0 0.0
    %236 = vmatpush1.xpose.msra.mxu0 0.0
    %237 = vmatprep.subr.mxu0 0.0
    %238 = vmatpush1.xpose.msra.mxu0 0.0
    %239 = vmatprep.subr.mxu0 0.0
    %240 = vmatpush1.xpose.msra.mxu0 0.0
    %241 = vmatprep.subr.mxu0 0.0
    %242 = vmatpush1.xpose.msra.mxu0 0.0
    %243 = vmatprep.subr.mxu0 0.0
    %244 = vmatpush1.xpose.msra.mxu0 0.0
    %245 = vmatprep.subr.mxu0 0.0
    %246 = vmatpush1.xpose.msra.mxu0 0.0
    %247 = vmatprep.subr.mxu0 0.0
    %248 = vmatpush1.xpose.msra.mxu0 0.0
    %249 = vmatprep.subr.mxu0 0.0
    %250 = vmatpush1.xpose.msra.mxu0 0.0
    %251 = vmatprep.subr.mxu0 0.0
    %252 = vmatpush1.xpose.msra.mxu0 0.0
    %253 = vmatprep.subr.mxu0 0.0
    %254 = vmatpush1.xpose.msra.mxu0 0.0
    %255 = vmatprep.subr.mxu0 0.0
    %256 = vmatpush1.xpose.msra.mxu0 0.0
    %257 = vmatprep.subr.mxu0 0.0
    %258 = vmatpush1.xpose.msra.mxu0 0.0
    %259 = vmatprep.subr.mxu0 0.0
    %260 = vmatpush1.xpose.msra.mxu0 0.0
    %261 = vmatprep.subr.mxu0 0.0
    %262 = vmatpush1.xpose.msra.mxu0 0.0
    %263 = vmatprep.subr.mxu0 0.0
    %264 = vmatpush1.xpose.msra.mxu0 0.0
    %265 = vmatprep.subr.mxu0 0.0
    %266 = vmatpush1.xpose.msra.mxu0 0.0
    %267 = vmatprep.subr.mxu0 0.0
    %268 = vmatpush1.xpose.msra.mxu0 0.0
    %269 = vmatprep.subr.mxu0 0.0
    %270 = vmatpush1.xpose.msra.mxu0 0.0
    %271 = vmatprep.subr.mxu0 0.0
    %272 = vmatpush1.xpose.msra.mxu0 0.0
    %273 = vmatprep.subr.mxu0 0.0
    %274 = vmatpush1.xpose.msra.mxu0 0.0
    %275 = vmatprep.subr.mxu0 0.0
    %276 = vmatpush1.xpose.msra.mxu0 0.0
    %277 = vmatprep.subr.mxu0 0.0
    %278 = vmatpush1.xpose.msra.mxu0 0.0
    %279 = vmatprep.subr.mxu0 0.0
    %280 = vmatpush1.xpose.msra.mxu0 0.0
    %281 = vmatprep.subr.mxu0 0.0
    %282 = vmatpush1.xpose.msra.mxu0 0.0
    %283 = vmatprep.subr.mxu0 0.0
    %284 = vmatpush1.xpose.msra.mxu0 0.0
    %285 = vmatprep.subr.mxu0 0.0
    %286 = vmatpush1.xpose.msra.mxu0 0.0
    %287 = vmatprep.subr.mxu0 0.0
    %288 = vmatpush1.xpose.msra.mxu0 0.0
    %289 = vmatprep.subr.mxu0 0.0
    %290 = vmatpush1.xpose.msra.mxu0 0.0
    %291 = vmatprep.subr.mxu0 0.0
    %292 = vmatpush1.xpose.msra.mxu0 0.0
    %293 = vmatprep.subr.mxu0 0.0
    %294 = vmatpush1.xpose.msra.mxu0 0.0
    %295 = vmatprep.mubr.f32.mxu0 0.0
    %296 = vmatmul.mubr.f32.gmra.mrb[0].mxu0 %v227
    %v297 = vpop.f32.mrb[0].mxu0
    %v298 = vadd.f32 0.0, %v297
    %v299 = vpop.f32.mrb[0].mxu0
    %300 = vdwg.mxu0
    %v301 = vsel %vm147, %v220, -inf
    %302 = vmax.xlane.f32.xlu0 %v301
    %v303 = vpop.xlane.xlu0 %302
    %v304 = vsel %vm147, %v298, -inf
    %305 = vmax.xlane.f32.xlu0 %v304
    %v306 = vpop.xlane.xlu0 %305
    %v307 = vsub.f32 %v220, %v303
    %v308 = vsub.f32 %v298, %v306
    %v309 = vmul.f32 %v307, 1.442695
    %v310 = vpow.pop %v309
    %v311 = vmul.f32 %v308, 1.442695
    %v312 = vpow.pop %v311
    %v313 = vsel %vm147, %v310, 0.0
    %314 = vadd.xlane.f32.xlu0 %v313
    %v315 = vpop.xlane.xlu0 %314
    %v316 = vsel %vm147, %v312, 0.0
    %317 = vadd.xlane.f32.xlu0 %v316
    %v318 = vpop.xlane.xlu0 %317
    %v319 = vrcp.pop %v315
    %v320 = vrcp.pop %v318
    %v321 = vmul.f32 %v310, %v319
    %v322 = vmul.f32 %v312, %v320
    %323 = vrot.lane.b32.xlu0 %v134, 64
    %v324 = vpop.permute.xlu0 %323
    %v327 = vsel %vm147, %v321, 0
    %329 = vmatprep.subr.mxu0 0.0
    %330 = vmatpush1.msra.mxu0 %v324
    %331 = vmatprep.subr.mxu0 0.0
    %332 = vmatpush1.msra.mxu0 0.0
    %333 = vmatprep.subr.mxu0 0.0
    %334 = vmatpush1.msra.mxu0 0.0
    %335 = vmatprep.subr.mxu0 0.0
    %336 = vmatpush1.msra.mxu0 0.0
    %337 = vmatprep.subr.mxu0 0.0
    %338 = vmatpush1.msra.mxu0 0.0
    %339 = vmatprep.subr.mxu0 0.0
    %340 = vmatpush1.msra.mxu0 0.0
    %341 = vmatprep.subr.mxu0 0.0
    %342 = vmatpush1.msra.mxu0 0.0
    %343 = vmatprep.subr.mxu0 0.0
    %344 = vmatpush1.msra.mxu0 0.0
    %345 = vmatprep.subr.mxu0 0.0
    %346 = vmatpush1.msra.mxu0 0.0
    %347 = vmatprep.subr.mxu0 0.0
    %348 = vmatpush1.msra.mxu0 0.0
    %349 = vmatprep.subr.mxu0 0.0
    %350 = vmatpush1.msra.mxu0 0.0
    %351 = vmatprep.subr.mxu0 0.0
    %352 = vmatpush1.msra.mxu0 0.0
    %353 = vmatprep.subr.mxu0 0.0
    %354 = vmatpush1.msra.mxu0 0.0
    %355 = vmatprep.subr.mxu0 0.0
    %356 = vmatpush1.msra.mxu0 0.0
    %357 = vmatprep.subr.mxu0 0.0
    %358 = vmatpush1.msra.mxu0 0.0
    %359 = vmatprep.subr.mxu0 0.0
    %360 = vmatpush1.msra.mxu0 0.0
    %361 = vmatprep.subr.mxu0 0.0
    %362 = vmatpush1.msra.mxu0 0.0
    %363 = vmatprep.subr.mxu0 0.0
    %364 = vmatpush1.msra.mxu0 0.0
    %365 = vmatprep.subr.mxu0 0.0
    %366 = vmatpush1.msra.mxu0 0.0
    %367 = vmatprep.subr.mxu0 0.0
    %368 = vmatpush1.msra.mxu0 0.0
    %369 = vmatprep.subr.mxu0 0.0
    %370 = vmatpush1.msra.mxu0 0.0
    %371 = vmatprep.subr.mxu0 0.0
    %372 = vmatpush1.msra.mxu0 0.0
    %373 = vmatprep.subr.mxu0 0.0
    %374 = vmatpush1.msra.mxu0 0.0
    %375 = vmatprep.subr.mxu0 0.0
    %376 = vmatpush1.msra.mxu0 0.0
    %377 = vmatprep.subr.mxu0 0.0
    %378 = vmatpush1.msra.mxu0 0.0
    %379 = vmatprep.subr.mxu0 0.0
    %380 = vmatpush1.msra.mxu0 0.0
    %381 = vmatprep.subr.mxu0 0.0
    %382 = vmatpush1.msra.mxu0 0.0
    %383 = vmatprep.subr.mxu0 0.0
    %384 = vmatpush1.msra.mxu0 0.0
    %385 = vmatprep.subr.mxu0 0.0
    %386 = vmatpush1.msra.mxu0 0.0
    %387 = vmatprep.subr.mxu0 0.0
    %388 = vmatpush1.msra.mxu0 0.0
    %389 = vmatprep.subr.mxu0 0.0
    %390 = vmatpush1.msra.mxu0 0.0
    %391 = vmatprep.subr.mxu0 0.0
    %392 = vmatpush1.msra.mxu0 0.0
    %393 = vmatprep.mubr.f32.mxu0 0.0
    %394 = vmatmul.mubr.f32.gmra.mrb[0].mxu0 %v327
    %v395 = vpop.f32.mrb[0].mxu0
    %v396 = vadd.f32 0.0, %v395
    %v397 = vpop.f32.mrb[0].mxu0
    %398 = vdwg.mxu0
    %399 = vrot.lane.b32.xlu0 %v139, 64
    %v400 = vpop.permute.xlu0 %399
    %v403 = vsel %vm147, %v322, 0
    %405 = vmatprep.subr.mxu0 0.0
    %406 = vmatpush1.msra.mxu0 %v400
    %407 = vmatprep.subr.mxu0 0.0
    %408 = vmatpush1.msra.mxu0 0.0
    %409 = vmatprep.subr.mxu0 0.0
    %410 = vmatpush1.msra.mxu0 0.0
    %411 = vmatprep.subr.mxu0 0.0
    %412 = vmatpush1.msra.mxu0 0.0
    %413 = vmatprep.subr.mxu0 0.0
    %414 = vmatpush1.msra.mxu0 0.0
    %415 = vmatprep.subr.mxu0 0.0
    %416 = vmatpush1.msra.mxu0 0.0
    %417 = vmatprep.subr.mxu0 0.0
    %418 = vmatpush1.msra.mxu0 0.0
    %419 = vmatprep.subr.mxu0 0.0
    %420 = vmatpush1.msra.mxu0 0.0
    %421 = vmatprep.subr.mxu0 0.0
    %422 = vmatpush1.msra.mxu0 0.0
    %423 = vmatprep.subr.mxu0 0.0
    %424 = vmatpush1.msra.mxu0 0.0
    %425 = vmatprep.subr.mxu0 0.0
    %426 = vmatpush1.msra.mxu0 0.0
    %427 = vmatprep.subr.mxu0 0.0
    %428 = vmatpush1.msra.mxu0 0.0
    %429 = vmatprep.subr.mxu0 0.0
    %430 = vmatpush1.msra.mxu0 0.0
    %431 = vmatprep.subr.mxu0 0.0
    %432 = vmatpush1.msra.mxu0 0.0
    %433 = vmatprep.subr.mxu0 0.0
    %434 = vmatpush1.msra.mxu0 0.0
    %435 = vmatprep.subr.mxu0 0.0
    %436 = vmatpush1.msra.mxu0 0.0
    %437 = vmatprep.subr.mxu0 0.0
    %438 = vmatpush1.msra.mxu0 0.0
    %439 = vmatprep.subr.mxu0 0.0
    %440 = vmatpush1.msra.mxu0 0.0
    %441 = vmatprep.subr.mxu0 0.0
    %442 = vmatpush1.msra.mxu0 0.0
    %443 = vmatprep.subr.mxu0 0.0
    %444 = vmatpush1.msra.mxu0 0.0
    %445 = vmatprep.subr.mxu0 0.0
    %446 = vmatpush1.msra.mxu0 0.0
    %447 = vmatprep.subr.mxu0 0.0
    %448 = vmatpush1.msra.mxu0 0.0
    %449 = vmatprep.subr.mxu0 0.0
    %450 = vmatpush1.msra.mxu0 0.0
    %451 = vmatprep.subr.mxu0 0.0
    %452 = vmatpush1.msra.mxu0 0.0
    %453 = vmatprep.subr.mxu0 0.0
    %454 = vmatpush1.msra.mxu0 0.0
    %455 = vmatprep.subr.mxu0 0.0
    %456 = vmatpush1.msra.mxu0 0.0
    %457 = vmatprep.subr.mxu0 0.0
    %458 = vmatpush1.msra.mxu0 0.0
    %459 = vmatprep.subr.mxu0 0.0
    %460 = vmatpush1.msra.mxu0 0.0
    %461 = vmatprep.subr.mxu0 0.0
    %462 = vmatpush1.msra.mxu0 0.0
    %463 = vmatprep.subr.mxu0 0.0
    %464 = vmatpush1.msra.mxu0 0.0
    %465 = vmatprep.subr.mxu0 0.0
    %466 = vmatpush1.msra.mxu0 0.0
    %467 = vmatprep.subr.mxu0 0.0
    %468 = vmatpush1.msra.mxu0 0.0
    %469 = vmatprep.mubr.f32.mxu0 0.0
    %470 = vmatmul.mubr.f32.gmra.mrb[0].mxu0 %v403
    %v471 = vpop.f32.mrb[0].mxu0
    %v472 = vadd.f32 0.0, %v471
    %v473 = vpop.f32.mrb[0].mxu0
    %474 = vdwg.mxu0
    %475 = vst.msk [vmem:[#allocation2] sm:$0xff] %vm147, %v396
    %476 = vst.msk [vmem:[#allocation2 + $0x8] sm:$0xff] %vm147, %v472
    %477 = vrot.lane.b32.xlu0 %v142, 120
    %v478 = vpop.permute.xlu0 %477
    %479 = vrot.lane.b32.xlu0 %v134, 88
    %v480 = vpop.permute.xlu0 %479
    %v481 = vsel %vm147, %v478, 0
    %v483 = vsel %vm147, %v480, 0
    %485 = vmatprep.subr.mxu0 0.0
    %486 = vmatpush1.xpose.msra.mxu0 %v483
    %487 = vmatprep.subr.mxu0 0.0
    %488 = vmatpush1.xpose.msra.mxu0 0.0
    %489 = vmatprep.subr.mxu0 0.0
    %490 = vmatpush1.xpose.msra.mxu0 0.0
    %491 = vmatprep.subr.mxu0 0.0
    %492 = vmatpush1.xpose.msra.mxu0 0.0
    %493 = vmatprep.subr.mxu0 0.0
    %494 = vmatpush1.xpose.msra.mxu0 0.0
    %495 = vmatprep.subr.mxu0 0.0
    %496 = vmatpush1.xpose.msra.mxu0 0.0
    %497 = vmatprep.subr.mxu0 0.0
    %498 = vmatpush1.xpose.msra.mxu0 0.0
    %499 = vmatprep.subr.mxu0 0.0
    %500 = vmatpush1.xpose.msra.mxu0 0.0
    %501 = vmatprep.subr.mxu0 0.0
    %502 = vmatpush1.xpose.msra.mxu0 0.0
    %503 = vmatprep.subr.mxu0 0.0
    %504 = vmatpush1.xpose.msra.mxu0 0.0
    %505 = vmatprep.subr.mxu0 0.0
    %506 = vmatpush1.xpose.msra.mxu0 0.0
    %507 = vmatprep.subr.mxu0 0.0
    %508 = vmatpush1.xpose.msra.mxu0 0.0
    %509 = vmatprep.subr.mxu0 0.0
    %510 = vmatpush1.xpose.msra.mxu0 0.0
    %511 = vmatprep.subr.mxu0 0.0
    %512 = vmatpush1.xpose.msra.mxu0 0.0
    %513 = vmatprep.subr.mxu0 0.0
    %514 = vmatpush1.xpose.msra.mxu0 0.0
    %515 = vmatprep.subr.mxu0 0.0
    %516 = vmatpush1.xpose.msra.mxu0 0.0
    %517 = vmatprep.subr.mxu0 0.0
    %518 = vmatpush1.xpose.msra.mxu0 0.0
    %519 = vmatprep.subr.mxu0 0.0
    %520 = vmatpush1.xpose.msra.mxu0 0.0
    %521 = vmatprep.subr.mxu0 0.0
    %522 = vmatpush1.xpose.msra.mxu0 0.0
    %523 = vmatprep.subr.mxu0 0.0
    %524 = vmatpush1.xpose.msra.mxu0 0.0
    %525 = vmatprep.subr.mxu0 0.0
    %526 = vmatpush1.xpose.msra.mxu0 0.0
    %527 = vmatprep.subr.mxu0 0.0
    %528 = vmatpush1.xpose.msra.mxu0 0.0
    %529 = vmatprep.subr.mxu0 0.0
    %530 = vmatpush1.xpose.msra.mxu0 0.0
    %531 = vmatprep.subr.mxu0 0.0
    %532 = vmatpush1.xpose.msra.mxu0 0.0
    %533 = vmatprep.subr.mxu0 0.0
    %534 = vmatpush1.xpose.msra.mxu0 0.0
    %535 = vmatprep.subr.mxu0 0.0
    %536 = vmatpush1.xpose.msra.mxu0 0.0
    %537 = vmatprep.subr.mxu0 0.0
    %538 = vmatpush1.xpose.msra.mxu0 0.0
    %539 = vmatprep.subr.mxu0 0.0
    %540 = vmatpush1.xpose.msra.mxu0 0.0
    %541 = vmatprep.subr.mxu0 0.0
    %542 = vmatpush1.xpose.msra.mxu0 0.0
    %543 = vmatprep.subr.mxu0 0.0
    %544 = vmatpush1.xpose.msra.mxu0 0.0
    %545 = vmatprep.subr.mxu0 0.0
    %546 = vmatpush1.xpose.msra.mxu0 0.0
    %547 = vmatprep.subr.mxu0 0.0
    %548 = vmatpush1.xpose.msra.mxu0 0.0
    %549 = vmatprep.mubr.f32.mxu0 0.0
    %550 = vmatmul.mubr.f32.gmra.mrb[0].mxu0 %v481
    %v551 = vpop.f32.mrb[0].mxu0
    %v552 = vadd.f32 0.0, %v551
    %v553 = vpop.f32.mrb[0].mxu0
    %554 = vdwg.mxu0
    %555 = vrot.lane.b32.xlu0 %v143, 120
    %v556 = vpop.permute.xlu0 %555
    %557 = vrot.lane.b32.xlu0 %v139, 88
    %v558 = vpop.permute.xlu0 %557
    %v559 = vsel %vm147, %v556, 0
    %v561 = vsel %vm147, %v558, 0
    %563 = vmatprep.subr.mxu0 0.0
    %564 = vmatpush1.xpose.msra.mxu0 %v561
    %565 = vmatprep.subr.mxu0 0.0
    %566 = vmatpush1.xpose.msra.mxu0 0.0
    %567 = vmatprep.subr.mxu0 0.0
    %568 = vmatpush1.xpose.msra.mxu0 0.0
    %569 = vmatprep.subr.mxu0 0.0
    %570 = vmatpush1.xpose.msra.mxu0 0.0
    %571 = vmatprep.subr.mxu0 0.0
    %572 = vmatpush1.xpose.msra.mxu0 0.0
    %573 = vmatprep.subr.mxu0 0.0
    %574 = vmatpush1.xpose.msra.mxu0 0.0
    %575 = vmatprep.subr.mxu0 0.0
    %576 = vmatpush1.xpose.msra.mxu0 0.0
    %577 = vmatprep.subr.mxu0 0.0
    %578 = vmatpush1.xpose.msra.mxu0 0.0
    %579 = vmatprep.subr.mxu0 0.0
    %580 = vmatpush1.xpose.msra.mxu0 0.0
    %581 = vmatprep.subr.mxu0 0.0
    %582 = vmatpush1.xpose.msra.mxu0 0.0
    %583 = vmatprep.subr.mxu0 0.0
    %584 = vmatpush1.xpose.msra.mxu0 0.0
    %585 = vmatprep.subr.mxu0 0.0
    %586 = vmatpush1.xpose.msra.mxu0 0.0
    %587 = vmatprep.subr.mxu0 0.0
    %588 = vmatpush1.xpose.msra.mxu0 0.0
    %589 = vmatprep.subr.mxu0 0.0
    %590 = vmatpush1.xpose.msra.mxu0 0.0
    %591 = vmatprep.subr.mxu0 0.0
    %592 = vmatpush1.xpose.msra.mxu0 0.0
    %593 = vmatprep.subr.mxu0 0.0
    %594 = vmatpush1.xpose.msra.mxu0 0.0
    %595 = vmatprep.subr.mxu0 0.0
    %596 = vmatpush1.xpose.msra.mxu0 0.0
    %597 = vmatprep.subr.mxu0 0.0
    %598 = vmatpush1.xpose.msra.mxu0 0.0
    %599 = vmatprep.subr.mxu0 0.0
    %600 = vmatpush1.xpose.msra.mxu0 0.0
    %601 = vmatprep.subr.mxu0 0.0
    %602 = vmatpush1.xpose.msra.mxu0 0.0
    %603 = vmatprep.subr.mxu0 0.0
    %604 = vmatpush1.xpose.msra.mxu0 0.0
    %605 = vmatprep.subr.mxu0 0.0
    %606 = vmatpush1.xpose.msra.mxu0 0.0
    %607 = vmatprep.subr.mxu0 0.0
    %608 = vmatpush1.xpose.msra.mxu0 0.0
    %609 = vmatprep.subr.mxu0 0.0
    %610 = vmatpush1.xpose.msra.mxu0 0.0
    %611 = vmatprep.subr.mxu0 0.0
    %612 = vmatpush1.xpose.msra.mxu0 0.0
    %613 = vmatprep.subr.mxu0 0.0
    %614 = vmatpush1.xpose.msra.mxu0 0.0
    %615 = vmatprep.subr.mxu0 0.0
    %616 = vmatpush1.xpose.msra.mxu0 0.0
    %617 = vmatprep.subr.mxu0 0.0
    %618 = vmatpush1.xpose.msra.mxu0 0.0
    %619 = vmatprep.subr.mxu0 0.0
    %620 = vmatpush1.xpose.msra.mxu0 0.0
    %621 = vmatprep.subr.mxu0 0.0
    %622 = vmatpush1.xpose.msra.mxu0 0.0
    %623 = vmatprep.subr.mxu0 0.0
    %624 = vmatpush1.xpose.msra.mxu0 0.0
    %625 = vmatprep.subr.mxu0 0.0
    %626 = vmatpush1.xpose.msra.mxu0 0.0
    %627 = vmatprep.mubr.f32.mxu0 0.0
    %628 = vmatmul.mubr.f32.gmra.mrb[0].mxu0 %v559
    %v629 = vpop.f32.mrb[0].mxu0
    %v630 = vadd.f32 0.0, %v629
    %v631 = vpop.f32.mrb[0].mxu0
    %632 = vdwg.mxu0
    %v633 = vsel %vm147, %v552, -inf
    %634 = vmax.xlane.f32.xlu0 %v633
    %v635 = vpop.xlane.xlu0 %634
    %v636 = vsel %vm147, %v630, -inf
    %637 = vmax.xlane.f32.xlu0 %v636
    %v638 = vpop.xlane.xlu0 %637
    %v639 = vsub.f32 %v552, %v635
    %v640 = vsub.f32 %v630, %v638
    %v641 = vmul.f32 %v639, 1.442695
    %v642 = vpow.pop %v641
    %v643 = vmul.f32 %v640, 1.442695
    %v644 = vpow.pop %v643
    %v645 = vsel %vm147, %v642, 0.0
    %646 = vadd.xlane.f32.xlu0 %v645
    %v647 = vpop.xlane.xlu0 %646
    %v648 = vsel %vm147, %v644, 0.0
    %649 = vadd.xlane.f32.xlu0 %v648
    %v650 = vpop.xlane.xlu0 %649
    %v651 = vrcp.pop %v647
    %v652 = vrcp.pop %v650
    %v653 = vmul.f32 %v642, %v651
    %v654 = vmul.f32 %v644, %v652
    %655 = vrot.lane.b32.xlu0 %v134, 56
    %v656 = vpop.permute.xlu0 %655
    %v659 = vsel %vm147, %v653, 0
    %661 = vmatprep.subr.mxu0 0.0
    %662 = vmatpush1.msra.mxu0 %v656
    %663 = vmatprep.subr.mxu0 0.0
    %664 = vmatpush1.msra.mxu0 0.0
    %665 = vmatprep.subr.mxu0 0.0
    %666 = vmatpush1.msra.mxu0 0.0
    %667 = vmatprep.subr.mxu0 0.0
    %668 = vmatpush1.msra.mxu0 0.0
    %669 = vmatprep.subr.mxu0 0.0
    %670 = vmatpush1.msra.mxu0 0.0
    %671 = vmatprep.subr.mxu0 0.0
    %672 = vmatpush1.msra.mxu0 0.0
    %673 = vmatprep.subr.mxu0 0.0
    %674 = vmatpush1.msra.mxu0 0.0
    %675 = vmatprep.subr.mxu0 0.0
    %676 = vmatpush1.msra.mxu0 0.0
    %677 = vmatprep.subr.mxu0 0.0
    %678 = vmatpush1.msra.mxu0 0.0
    %679 = vmatprep.subr.mxu0 0.0
    %680 = vmatpush1.msra.mxu0 0.0
    %681 = vmatprep.subr.mxu0 0.0
    %682 = vmatpush1.msra.mxu0 0.0
    %683 = vmatprep.subr.mxu0 0.0
    %684 = vmatpush1.msra.mxu0 0.0
    %685 = vmatprep.subr.mxu0 0.0
    %686 = vmatpush1.msra.mxu0 0.0
    %687 = vmatprep.subr.mxu0 0.0
    %688 = vmatpush1.msra.mxu0 0.0
    %689 = vmatprep.subr.mxu0 0.0
    %690 = vmatpush1.msra.mxu0 0.0
    %691 = vmatprep.subr.mxu0 0.0
    %692 = vmatpush1.msra.mxu0 0.0
    %693 = vmatprep.subr.mxu0 0.0
    %694 = vmatpush1.msra.mxu0 0.0
    %695 = vmatprep.subr.mxu0 0.0
    %696 = vmatpush1.msra.mxu0 0.0
    %697 = vmatprep.subr.mxu0 0.0
    %698 = vmatpush1.msra.mxu0 0.0
    %699 = vmatprep.subr.mxu0 0.0
    %700 = vmatpush1.msra.mxu0 0.0
    %701 = vmatprep.subr.mxu0 0.0
    %702 = vmatpush1.msra.mxu0 0.0
    %703 = vmatprep.subr.mxu0 0.0
    %704 = vmatpush1.msra.mxu0 0.0
    %705 = vmatprep.subr.mxu0 0.0
    %706 = vmatpush1.msra.mxu0 0.0
    %707 = vmatprep.subr.mxu0 0.0
    %708 = vmatpush1.msra.mxu0 0.0
    %709 = vmatprep.subr.mxu0 0.0
    %710 = vmatpush1.msra.mxu0 0.0
    %711 = vmatprep.subr.mxu0 0.0
    %712 = vmatpush1.msra.mxu0 0.0
    %713 = vmatprep.subr.mxu0 0.0
    %714 = vmatpush1.msra.mxu0 0.0
    %715 = vmatprep.subr.mxu0 0.0
    %716 = vmatpush1.msra.mxu0 0.0
    %717 = vmatprep.subr.mxu0 0.0
    %718 = vmatpush1.msra.mxu0 0.0
    %719 = vmatprep.subr.mxu0 0.0
    %720 = vmatpush1.msra.mxu0 0.0
    %721 = vmatprep.subr.mxu0 0.0
    %722 = vmatpush1.msra.mxu0 0.0
    %723 = vmatprep.subr.mxu0 0.0
    %724 = vmatpush1.msra.mxu0 0.0
    %725 = vmatprep.mubr.f32.mxu0 0.0
    %726 = vmatmul.mubr.f32.gmra.mrb[0].mxu0 %v659
    %v727 = vpop.f32.mrb[0].mxu0
    %v728 = vadd.f32 0.0, %v727
    %v729 = vpop.f32.mrb[0].mxu0
    %730 = vdwg.mxu0
    %731 = vrot.lane.b32.xlu0 %v139, 56
    %v732 = vpop.permute.xlu0 %731
    %v735 = vsel %vm147, %v654, 0
    %737 = vmatprep.subr.mxu0 0.0
    %738 = vmatpush1.msra.mxu0 %v732
    %739 = vmatprep.subr.mxu0 0.0
    %740 = vmatpush1.msra.mxu0 0.0
    %741 = vmatprep.subr.mxu0 0.0
    %742 = vmatpush1.msra.mxu0 0.0
    %743 = vmatprep.subr.mxu0 0.0
    %744 = vmatpush1.msra.mxu0 0.0
    %745 = vmatprep.subr.mxu0 0.0
    %746 = vmatpush1.msra.mxu0 0.0
    %747 = vmatprep.subr.mxu0 0.0
    %748 = vmatpush1.msra.mxu0 0.0
    %749 = vmatprep.subr.mxu0 0.0
    %750 = vmatpush1.msra.mxu0 0.0
    %751 = vmatprep.subr.mxu0 0.0
    %752 = vmatpush1.msra.mxu0 0.0
    %753 = vmatprep.subr.mxu0 0.0
    %754 = vmatpush1.msra.mxu0 0.0
    %755 = vmatprep.subr.mxu0 0.0
    %756 = vmatpush1.msra.mxu0 0.0
    %757 = vmatprep.subr.mxu0 0.0
    %758 = vmatpush1.msra.mxu0 0.0
    %759 = vmatprep.subr.mxu0 0.0
    %760 = vmatpush1.msra.mxu0 0.0
    %761 = vmatprep.subr.mxu0 0.0
    %762 = vmatpush1.msra.mxu0 0.0
    %763 = vmatprep.subr.mxu0 0.0
    %764 = vmatpush1.msra.mxu0 0.0
    %765 = vmatprep.subr.mxu0 0.0
    %766 = vmatpush1.msra.mxu0 0.0
    %767 = vmatprep.subr.mxu0 0.0
    %768 = vmatpush1.msra.mxu0 0.0
    %769 = vmatprep.subr.mxu0 0.0
    %770 = vmatpush1.msra.mxu0 0.0
    %771 = vmatprep.subr.mxu0 0.0
    %772 = vmatpush1.msra.mxu0 0.0
    %773 = vmatprep.subr.mxu0 0.0
    %774 = vmatpush1.msra.mxu0 0.0
    %775 = vmatprep.subr.mxu0 0.0
    %776 = vmatpush1.msra.mxu0 0.0
    %777 = vmatprep.subr.mxu0 0.0
    %778 = vmatpush1.msra.mxu0 0.0
    %779 = vmatprep.subr.mxu0 0.0
    %780 = vmatpush1.msra.mxu0 0.0
    %781 = vmatprep.subr.mxu0 0.0
    %782 = vmatpush1.msra.mxu0 0.0
    %783 = vmatprep.subr.mxu0 0.0
    %784 = vmatpush1.msra.mxu0 0.0
    %785 = vmatprep.subr.mxu0 0.0
    %786 = vmatpush1.msra.mxu0 0.0
    %787 = vmatprep.subr.mxu0 0.0
    %788 = vmatpush1.msra.mxu0 0.0
    %789 = vmatprep.subr.mxu0 0.0
    %790 = vmatpush1.msra.mxu0 0.0
    %791 = vmatprep.subr.mxu0 0.0
    %792 = vmatpush1.msra.mxu0 0.0
    %793 = vmatprep.subr.mxu0 0.0
    %794 = vmatpush1.msra.mxu0 0.0
    %795 = vmatprep.subr.mxu0 0.0
    %796 = vmatpush1.msra.mxu0 0.0
    %797 = vmatprep.subr.mxu0 0.0
    %798 = vmatpush1.msra.mxu0 0.0
    %799 = vmatprep.subr.mxu0 0.0
    %800 = vmatpush1.msra.mxu0 0.0
    %801 = vmatprep.mubr.f32.mxu0 0.0
    %802 = vmatmul.mubr.f32.gmra.mrb[0].mxu0 %v735
    %v803 = vpop.f32.mrb[0].mxu0
    %v804 = vadd.f32 0.0, %v803
    %v805 = vpop.f32.mrb[0].mxu0
    %806 = vdwg.mxu0
    %809 = vrot.lane.b32.xlu0 %v728, 8
    %v810 = vpop.permute.xlu0 %809
    %811 = vrot.lane.b32.xlu0 %v804, 8
    %v812 = vpop.permute.xlu0 %811
    %vm815 = vcmask 130112
    %816 = vst.msk [vmem:[#allocation2] sm:$0xff] %vm815, %v810
    %817 = vst.msk [vmem:[#allocation2 + $0x8] sm:$0xff] %vm815, %v812
    %818 = vrot.lane.b32.xlu0 %v142, 112
    %v819 = vpop.permute.xlu0 %818
    %820 = vrot.lane.b32.xlu0 %v134, 80
    %v821 = vpop.permute.xlu0 %820
    %v822 = vsel %vm147, %v819, 0
    %v824 = vsel %vm147, %v821, 0
    %826 = vmatprep.subr.mxu0 0.0
    %827 = vmatpush1.xpose.msra.mxu0 %v824
    %828 = vmatprep.subr.mxu0 0.0
    %829 = vmatpush1.xpose.msra.mxu0 0.0
    %830 = vmatprep.subr.mxu0 0.0
    %831 = vmatpush1.xpose.msra.mxu0 0.0
    %832 = vmatprep.subr.mxu0 0.0
    %833 = vmatpush1.xpose.msra.mxu0 0.0
    %834 = vmatprep.subr.mxu0 0.0
    %835 = vmatpush1.xpose.msra.mxu0 0.0
    %836 = vmatprep.subr.mxu0 0.0
    %837 = vmatpush1.xpose.msra.mxu0 0.0
    %838 = vmatprep.subr.mxu0 0.0
    %839 = vmatpush1.xpose.msra.mxu0 0.0
    %840 = vmatprep.subr.mxu0 0.0
    %841 = vmatpush1.xpose.msra.mxu0 0.0
    %842 = vmatprep.subr.mxu0 0.0
    %843 = vmatpush1.xpose.msra.mxu0 0.0
    %844 = vmatprep.subr.mxu0 0.0
    %845 = vmatpush1.xpose.msra.mxu0 0.0
    %846 = vmatprep.subr.mxu0 0.0
    %847 = vmatpush1.xpose.msra.mxu0 0.0
    %848 = vmatprep.subr.mxu0 0.0
    %849 = vmatpush1.xpose.msra.mxu0 0.0
    %850 = vmatprep.subr.mxu0 0.0
    %851 = vmatpush1.xpose.msra.mxu0 0.0
    %852 = vmatprep.subr.mxu0 0.0
    %853 = vmatpush1.xpose.msra.mxu0 0.0
    %854 = vmatprep.subr.mxu0 0.0
    %855 = vmatpush1.xpose.msra.mxu0 0.0
    %856 = vmatprep.subr.mxu0 0.0
    %857 = vmatpush1.xpose.msra.mxu0 0.0
    %858 = vmatprep.subr.mxu0 0.0
    %859 = vmatpush1.xpose.msra.mxu0 0.0
    %860 = vmatprep.subr.mxu0 0.0
    %861 = vmatpush1.xpose.msra.mxu0 0.0
    %862 = vmatprep.subr.mxu0 0.0
    %863 = vmatpush1.xpose.msra.mxu0 0.0
    %864 = vmatprep.subr.mxu0 0.0
    %865 = vmatpush1.xpose.msra.mxu0 0.0
    %866 = vmatprep.subr.mxu0 0.0
    %867 = vmatpush1.xpose.msra.mxu0 0.0
    %868 = vmatprep.subr.mxu0 0.0
    %869 = vmatpush1.xpose.msra.mxu0 0.0
    %870 = vmatprep.subr.mxu0 0.0
    %871 = vmatpush1.xpose.msra.mxu0 0.0
    %872 = vmatprep.subr.mxu0 0.0
    %873 = vmatpush1.xpose.msra.mxu0 0.0
    %874 = vmatprep.subr.mxu0 0.0
    %875 = vmatpush1.xpose.msra.mxu0 0.0
    %876 = vmatprep.subr.mxu0 0.0
    %877 = vmatpush1.xpose.msra.mxu0 0.0
    %878 = vmatprep.subr.mxu0 0.0
    %879 = vmatpush1.xpose.msra.mxu0 0.0
    %880 = vmatprep.subr.mxu0 0.0
    %881 = vmatpush1.xpose.msra.mxu0 0.0
    %882 = vmatprep.subr.mxu0 0.0
    %883 = vmatpush1.xpose.msra.mxu0 0.0
    %884 = vmatprep.subr.mxu0 0.0
    %885 = vmatpush1.xpose.msra.mxu0 0.0
    %886 = vmatprep.subr.mxu0 0.0
    %887 = vmatpush1.xpose.msra.mxu0 0.0
    %888 = vmatprep.subr.mxu0 0.0
    %889 = vmatpush1.xpose.msra.mxu0 0.0
    %890 = vmatprep.mubr.f32.mxu0 0.0
    %891 = vmatmul.mubr.f32.gmra.mrb[0].mxu0 %v822
    %v892 = vpop.f32.mrb[0].mxu0
    %v893 = vadd.f32 0.0, %v892
    %v894 = vpop.f32.mrb[0].mxu0
    %895 = vdwg.mxu0
    %896 = vrot.lane.b32.xlu0 %v143, 112
    %v897 = vpop.permute.xlu0 %896
    %898 = vrot.lane.b32.xlu0 %v139, 80
    %v899 = vpop.permute.xlu0 %898
    %v900 = vsel %vm147, %v897, 0
    %v902 = vsel %vm147, %v899, 0
    %904 = vmatprep.subr.mxu0 0.0
    %905 = vmatpush1.xpose.msra.mxu0 %v902
    %906 = vmatprep.subr.mxu0 0.0
    %907 = vmatpush1.xpose.msra.mxu0 0.0
    %908 = vmatprep.subr.mxu0 0.0
    %909 = vmatpush1.xpose.msra.mxu0 0.0
    %910 = vmatprep.subr.mxu0 0.0
    %911 = vmatpush1.xpose.msra.mxu0 0.0
    %912 = vmatprep.subr.mxu0 0.0
    %913 = vmatpush1.xpose.msra.mxu0 0.0
    %914 = vmatprep.subr.mxu0 0.0
    %915 = vmatpush1.xpose.msra.mxu0 0.0
    %916 = vmatprep.subr.mxu0 0.0
    %917 = vmatpush1.xpose.msra.mxu0 0.0
    %918 = vmatprep.subr.mxu0 0.0
    %919 = vmatpush1.xpose.msra.mxu0 0.0
    %920 = vmatprep.subr.mxu0 0.0
    %921 = vmatpush1.xpose.msra.mxu0 0.0
    %922 = vmatprep.subr.mxu0 0.0
    %923 = vmatpush1.xpose.msra.mxu0 0.0
    %924 = vmatprep.subr.mxu0 0.0
    %925 = vmatpush1.xpose.msra.mxu0 0.0
    %926 = vmatprep.subr.mxu0 0.0
    %927 = vmatpush1.xpose.msra.mxu0 0.0
    %928 = vmatprep.subr.mxu0 0.0
    %929 = vmatpush1.xpose.msra.mxu0 0.0
    %930 = vmatprep.subr.mxu0 0.0
    %931 = vmatpush1.xpose.msra.mxu0 0.0
    %932 = vmatprep.subr.mxu0 0.0
    %933 = vmatpush1.xpose.msra.mxu0 0.0
    %934 = vmatprep.subr.mxu0 0.0
    %935 = vmatpush1.xpose.msra.mxu0 0.0
    %936 = vmatprep.subr.mxu0 0.0
    %937 = vmatpush1.xpose.msra.mxu0 0.0
    %938 = vmatprep.subr.mxu0 0.0
    %939 = vmatpush1.xpose.msra.mxu0 0.0
    %940 = vmatprep.subr.mxu0 0.0
    %941 = vmatpush1.xpose.msra.mxu0 0.0
    %942 = vmatprep.subr.mxu0 0.0
    %943 = vmatpush1.xpose.msra.mxu0 0.0
    %944 = vmatprep.subr.mxu0 0.0
    %945 = vmatpush1.xpose.msra.mxu0 0.0
    %946 = vmatprep.subr.mxu0 0.0
    %947 = vmatpush1.xpose.msra.mxu0 0.0
    %948 = vmatprep.subr.mxu0 0.0
    %949 = vmatpush1.xpose.msra.mxu0 0.0
    %950 = vmatprep.subr.mxu0 0.0
    %951 = vmatpush1.xpose.msra.mxu0 0.0
    %952 = vmatprep.subr.mxu0 0.0
    %953 = vmatpush1.xpose.msra.mxu0 0.0
    %954 = vmatprep.subr.mxu0 0.0
    %955 = vmatpush1.xpose.msra.mxu0 0.0
    %956 = vmatprep.subr.mxu0 0.0
    %957 = vmatpush1.xpose.msra.mxu0 0.0
    %958 = vmatprep.subr.mxu0 0.0
    %959 = vmatpush1.xpose.msra.mxu0 0.0
    %960 = vmatprep.subr.mxu0 0.0
    %961 = vmatpush1.xpose.msra.mxu0 0.0
    %962 = vmatprep.subr.mxu0 0.0
    %963 = vmatpush1.xpose.msra.mxu0 0.0
    %964 = vmatprep.subr.mxu0 0.0
    %965 = vmatpush1.xpose.msra.mxu0 0.0
    %966 = vmatprep.subr.mxu0 0.0
    %967 = vmatpush1.xpose.msra.mxu0 0.0
    %968 = vmatprep.mubr.f32.mxu0 0.0
    %969 = vmatmul.mubr.f32.gmra.mrb[0].mxu0 %v900
    %v970 = vpop.f32.mrb[0].mxu0
    %v971 = vadd.f32 0.0, %v970
    %v972 = vpop.f32.mrb[0].mxu0
    %973 = vdwg.mxu0
    %v974 = vsel %vm147, %v893, -inf
    %975 = vmax.xlane.f32.xlu0 %v974
    %v976 = vpop.xlane.xlu0 %975
    %v977 = vsel %vm147, %v971, -inf
    %978 = vmax.xlane.f32.xlu0 %v977
    %v979 = vpop.xlane.xlu0 %978
    %v980 = vsub.f32 %v893, %v976
    %v981 = vsub.f32 %v971, %v979
    %v982 = vmul.f32 %v980, 1.442695
    %v983 = vpow.pop %v982
    %v984 = vmul.f32 %v981, 1.442695
    %v985 = vpow.pop %v984
    %v986 = vsel %vm147, %v983, 0.0
    %987 = vadd.xlane.f32.xlu0 %v986
    %v988 = vpop.xlane.xlu0 %987
    %v989 = vsel %vm147, %v985, 0.0
    %990 = vadd.xlane.f32.xlu0 %v989
    %v991 = vpop.xlane.xlu0 %990
    %v992 = vrcp.pop %v988
    %v993 = vrcp.pop %v991
    %v994 = vmul.f32 %v983, %v992
    %v995 = vmul.f32 %v985, %v993
    %996 = vrot.lane.b32.xlu0 %v134, 48
    %v997 = vpop.permute.xlu0 %996
    %v1000 = vsel %vm147, %v994, 0
    %1002 = vmatprep.subr.mxu0 0.0
    %1003 = vmatpush1.msra.mxu0 %v997
    %1004 = vmatprep.subr.mxu0 0.0
    %1005 = vmatpush1.msra.mxu0 0.0
    %1006 = vmatprep.subr.mxu0 0.0
    %1007 = vmatpush1.msra.mxu0 0.0
    %1008 = vmatprep.subr.mxu0 0.0
    %1009 = vmatpush1.msra.mxu0 0.0
    %1010 = vmatprep.subr.mxu0 0.0
    %1011 = vmatpush1.msra.mxu0 0.0
    %1012 = vmatprep.subr.mxu0 0.0
    %1013 = vmatpush1.msra.mxu0 0.0
    %1014 = vmatprep.subr.mxu0 0.0
    %1015 = vmatpush1.msra.mxu0 0.0
    %1016 = vmatprep.subr.mxu0 0.0
    %1017 = vmatpush1.msra.mxu0 0.0
    %1018 = vmatprep.subr.mxu0 0.0
    %1019 = vmatpush1.msra.mxu0 0.0
    %1020 = vmatprep.subr.mxu0 0.0
    %1021 = vmatpush1.msra.mxu0 0.0
    %1022 = vmatprep.subr.mxu0 0.0
    %1023 = vmatpush1.msra.mxu0 0.0
    %1024 = vmatprep.subr.mxu0 0.0
    %1025 = vmatpush1.msra.mxu0 0.0
    %1026 = vmatprep.subr.mxu0 0.0
    %1027 = vmatpush1.msra.mxu0 0.0
    %1028 = vmatprep.subr.mxu0 0.0
    %1029 = vmatpush1.msra.mxu0 0.0
    %1030 = vmatprep.subr.mxu0 0.0
    %1031 = vmatpush1.msra.mxu0 0.0
    %1032 = vmatprep.subr.mxu0 0.0
    %1033 = vmatpush1.msra.mxu0 0.0
    %1034 = vmatprep.subr.mxu0 0.0
    %1035 = vmatpush1.msra.mxu0 0.0
    %1036 = vmatprep.subr.mxu0 0.0
    %1037 = vmatpush1.msra.mxu0 0.0
    %1038 = vmatprep.subr.mxu0 0.0
    %1039 = vmatpush1.msra.mxu0 0.0
    %1040 = vmatprep.subr.mxu0 0.0
    %1041 = vmatpush1.msra.mxu0 0.0
    %1042 = vmatprep.subr.mxu0 0.0
    %1043 = vmatpush1.msra.mxu0 0.0
    %1044 = vmatprep.subr.mxu0 0.0
    %1045 = vmatpush1.msra.mxu0 0.0
    %1046 = vmatprep.subr.mxu0 0.0
    %1047 = vmatpush1.msra.mxu0 0.0
    %1048 = vmatprep.subr.mxu0 0.0
    %1049 = vmatpush1.msra.mxu0 0.0
    %1050 = vmatprep.subr.mxu0 0.0
    %1051 = vmatpush1.msra.mxu0 0.0
    %1052 = vmatprep.subr.mxu0 0.0
    %1053 = vmatpush1.msra.mxu0 0.0
    %1054 = vmatprep.subr.mxu0 0.0
    %1055 = vmatpush1.msra.mxu0 0.0
    %1056 = vmatprep.subr.mxu0 0.0
    %1057 = vmatpush1.msra.mxu0 0.0
    %1058 = vmatprep.subr.mxu0 0.0
    %1059 = vmatpush1.msra.mxu0 0.0
    %1060 = vmatprep.subr.mxu0 0.0
    %1061 = vmatpush1.msra.mxu0 0.0
    %1062 = vmatprep.subr.mxu0 0.0
    %1063 = vmatpush1.msra.mxu0 0.0
    %1064 = vmatprep.subr.mxu0 0.0
    %1065 = vmatpush1.msra.mxu0 0.0
    %1066 = vmatprep.mubr.f32.mxu0 0.0
    %1067 = vmatmul.mubr.f32.gmra.mrb[0].mxu0 %v1000
    %v1068 = vpop.f32.mrb[0].mxu0
    %v1069 = vadd.f32 0.0, %v1068
    %v1070 = vpop.f32.mrb[0].mxu0
    %1071 = vdwg.mxu0
    %1072 = vrot.lane.b32.xlu0 %v139, 48
    %v1073 = vpop.permute.xlu0 %1072
    %v1076 = vsel %vm147, %v995, 0
    %1078 = vmatprep.subr.mxu0 0.0
    %1079 = vmatpush1.msra.mxu0 %v1073
    %1080 = vmatprep.subr.mxu0 0.0
    %1081 = vmatpush1.msra.mxu0 0.0
    %1082 = vmatprep.subr.mxu0 0.0
    %1083 = vmatpush1.msra.mxu0 0.0
    %1084 = vmatprep.subr.mxu0 0.0
    %1085 = vmatpush1.msra.mxu0 0.0
    %1086 = vmatprep.subr.mxu0 0.0
    %1087 = vmatpush1.msra.mxu0 0.0
    %1088 = vmatprep.subr.mxu0 0.0
    %1089 = vmatpush1.msra.mxu0 0.0
    %1090 = vmatprep.subr.mxu0 0.0
    %1091 = vmatpush1.msra.mxu0 0.0
    %1092 = vmatprep.subr.mxu0 0.0
    %1093 = vmatpush1.msra.mxu0 0.0
    %1094 = vmatprep.subr.mxu0 0.0
    %1095 = vmatpush1.msra.mxu0 0.0
    %1096 = vmatprep.subr.mxu0 0.0
    %1097 = vmatpush1.msra.mxu0 0.0
    %1098 = vmatprep.subr.mxu0 0.0
    %1099 = vmatpush1.msra.mxu0 0.0
    %1100 = vmatprep.subr.mxu0 0.0
    %1101 = vmatpush1.msra.mxu0 0.0
    %1102 = vmatprep.subr.mxu0 0.0
    %1103 = vmatpush1.msra.mxu0 0.0
    %1104 = vmatprep.subr.mxu0 0.0
    %1105 = vmatpush1.msra.mxu0 0.0
    %1106 = vmatprep.subr.mxu0 0.0
    %1107 = vmatpush1.msra.mxu0 0.0
    %1108 = vmatprep.subr.mxu0 0.0
    %1109 = vmatpush1.msra.mxu0 0.0
    %1110 = vmatprep.subr.mxu0 0.0
    %1111 = vmatpush1.msra.mxu0 0.0
    %1112 = vmatprep.subr.mxu0 0.0
    %1113 = vmatpush1.msra.mxu0 0.0
    %1114 = vmatprep.subr.mxu0 0.0
    %1115 = vmatpush1.msra.mxu0 0.0
    %1116 = vmatprep.subr.mxu0 0.0
    %1117 = vmatpush1.msra.mxu0 0.0
    %1118 = vmatprep.subr.mxu0 0.0
    %1119 = vmatpush1.msra.mxu0 0.0
    %1120 = vmatprep.subr.mxu0 0.0
    %1121 = vmatpush1.msra.mxu0 0.0
    %1122 = vmatprep.subr.mxu0 0.0
    %1123 = vmatpush1.msra.mxu0 0.0
    %1124 = vmatprep.subr.mxu0 0.0
    %1125 = vmatpush1.msra.mxu0 0.0
    %1126 = vmatprep.subr.mxu0 0.0
    %1127 = vmatpush1.msra.mxu0 0.0
    %1128 = vmatprep.subr.mxu0 0.0
    %1129 = vmatpush1.msra.mxu0 0.0
    %1130 = vmatprep.subr.mxu0 0.0
    %1131 = vmatpush1.msra.mxu0 0.0
    %1132 = vmatprep.subr.mxu0 0.0
    %1133 = vmatpush1.msra.mxu0 0.0
    %1134 = vmatprep.subr.mxu0 0.0
    %1135 = vmatpush1.msra.mxu0 0.0
    %1136 = vmatprep.subr.mxu0 0.0
    %1137 = vmatpush1.msra.mxu0 0.0
    %1138 = vmatprep.subr.mxu0 0.0
    %1139 = vmatpush1.msra.mxu0 0.0
    %1140 = vmatprep.subr.mxu0 0.0
    %1141 = vmatpush1.msra.mxu0 0.0
    %1142 = vmatprep.mubr.f32.mxu0 0.0
    %1143 = vmatmul.mubr.f32.gmra.mrb[0].mxu0 %v1076
    %v1144 = vpop.f32.mrb[0].mxu0
    %v1145 = vadd.f32 0.0, %v1144
    %v1146 = vpop.f32.mrb[0].mxu0
    %1147 = vdwg.mxu0
    %1150 = vrot.lane.b32.xlu0 %v1069, 16
    %v1151 = vpop.permute.xlu0 %1150
    %1152 = vrot.lane.b32.xlu0 %v1145, 16
    %v1153 = vpop.permute.xlu0 %1152
    %vm1156 = vcmask 195712
    %1157 = vst.msk [vmem:[#allocation2] sm:$0xff] %vm1156, %v1151
    %1158 = vst.msk [vmem:[#allocation2 + $0x8] sm:$0xff] %vm1156, %v1153
    %1159 = vrot.lane.b32.xlu0 %v142, 104
    %v1160 = vpop.permute.xlu0 %1159
    %1161 = vrot.lane.b32.xlu0 %v134, 72
    %v1162 = vpop.permute.xlu0 %1161
    %v1163 = vsel %vm147, %v1160, 0
    %v1165 = vsel %vm147, %v1162, 0
    %1167 = vmatprep.subr.mxu0 0.0
    %1168 = vmatpush1.xpose.msra.mxu0 %v1165
    %1169 = vmatprep.subr.mxu0 0.0
    %1170 = vmatpush1.xpose.msra.mxu0 0.0
    %1171 = vmatprep.subr.mxu0 0.0
    %1172 = vmatpush1.xpose.msra.mxu0 0.0
    %1173 = vmatprep.subr.mxu0 0.0
    %1174 = vmatpush1.xpose.msra.mxu0 0.0
    %1175 = vmatprep.subr.mxu0 0.0
    %1176 = vmatpush1.xpose.msra.mxu0 0.0
    %1177 = vmatprep.subr.mxu0 0.0
    %1178 = vmatpush1.xpose.msra.mxu0 0.0
    %1179 = vmatprep.subr.mxu0 0.0
    %1180 = vmatpush1.xpose.msra.mxu0 0.0
    %1181 = vmatprep.subr.mxu0 0.0
    %1182 = vmatpush1.xpose.msra.mxu0 0.0
    %1183 = vmatprep.subr.mxu0 0.0
    %1184 = vmatpush1.xpose.msra.mxu0 0.0
    %1185 = vmatprep.subr.mxu0 0.0
    %1186 = vmatpush1.xpose.msra.mxu0 0.0
    %1187 = vmatprep.subr.mxu0 0.0
    %1188 = vmatpush1.xpose.msra.mxu0 0.0
    %1189 = vmatprep.subr.mxu0 0.0
    %1190 = vmatpush1.xpose.msra.mxu0 0.0
    %1191 = vmatprep.subr.mxu0 0.0
    %1192 = vmatpush1.xpose.msra.mxu0 0.0
    %1193 = vmatprep.subr.mxu0 0.0
    %1194 = vmatpush1.xpose.msra.mxu0 0.0
    %1195 = vmatprep.subr.mxu0 0.0
    %1196 = vmatpush1.xpose.msra.mxu0 0.0
    %1197 = vmatprep.subr.mxu0 0.0
    %1198 = vmatpush1.xpose.msra.mxu0 0.0
    %1199 = vmatprep.subr.mxu0 0.0
    %1200 = vmatpush1.xpose.msra.mxu0 0.0
    %1201 = vmatprep.subr.mxu0 0.0
    %1202 = vmatpush1.xpose.msra.mxu0 0.0
    %1203 = vmatprep.subr.mxu0 0.0
    %1204 = vmatpush1.xpose.msra.mxu0 0.0
    %1205 = vmatprep.subr.mxu0 0.0
    %1206 = vmatpush1.xpose.msra.mxu0 0.0
    %1207 = vmatprep.subr.mxu0 0.0
    %1208 = vmatpush1.xpose.msra.mxu0 0.0
    %1209 = vmatprep.subr.mxu0 0.0
    %1210 = vmatpush1.xpose.msra.mxu0 0.0
    %1211 = vmatprep.subr.mxu0 0.0
    %1212 = vmatpush1.xpose.msra.mxu0 0.0
    %1213 = vmatprep.subr.mxu0 0.0
    %1214 = vmatpush1.xpose.msra.mxu0 0.0
    %1215 = vmatprep.subr.mxu0 0.0
    %1216 = vmatpush1.xpose.msra.mxu0 0.0
    %1217 = vmatprep.subr.mxu0 0.0
    %1218 = vmatpush1.xpose.msra.mxu0 0.0
    %1219 = vmatprep.subr.mxu0 0.0
    %1220 = vmatpush1.xpose.msra.mxu0 0.0
    %1221 = vmatprep.subr.mxu0 0.0
    %1222 = vmatpush1.xpose.msra.mxu0 0.0
    %1223 = vmatprep.subr.mxu0 0.0
    %1224 = vmatpush1.xpose.msra.mxu0 0.0
    %1225 = vmatprep.subr.mxu0 0.0
    %1226 = vmatpush1.xpose.msra.mxu0 0.0
    %1227 = vmatprep.subr.mxu0 0.0
    %1228 = vmatpush1.xpose.msra.mxu0 0.0
    %1229 = vmatprep.subr.mxu0 0.0
    %1230 = vmatpush1.xpose.msra.mxu0 0.0
    %1231 = vmatprep.mubr.f32.mxu0 0.0
    %1232 = vmatmul.mubr.f32.gmra.mrb[0].mxu0 %v1163
    %v1233 = vpop.f32.mrb[0].mxu0
    %v1234 = vadd.f32 0.0, %v1233
    %v1235 = vpop.f32.mrb[0].mxu0
    %1236 = vdwg.mxu0
    %1237 = vrot.lane.b32.xlu0 %v143, 104
    %v1238 = vpop.permute.xlu0 %1237
    %1239 = vrot.lane.b32.xlu0 %v139, 72
    %v1240 = vpop.permute.xlu0 %1239
    %v1241 = vsel %vm147, %v1238, 0
    %v1243 = vsel %vm147, %v1240, 0
    %1245 = vmatprep.subr.mxu0 0.0
    %1246 = vmatpush1.xpose.msra.mxu0 %v1243
    %1247 = vmatprep.subr.mxu0 0.0
    %1248 = vmatpush1.xpose.msra.mxu0 0.0
    %1249 = vmatprep.subr.mxu0 0.0
    %1250 = vmatpush1.xpose.msra.mxu0 0.0
    %1251 = vmatprep.subr.mxu0 0.0
    %1252 = vmatpush1.xpose.msra.mxu0 0.0
    %1253 = vmatprep.subr.mxu0 0.0
    %1254 = vmatpush1.xpose.msra.mxu0 0.0
    %1255 = vmatprep.subr.mxu0 0.0
    %1256 = vmatpush1.xpose.msra.mxu0 0.0
    %1257 = vmatprep.subr.mxu0 0.0
    %1258 = vmatpush1.xpose.msra.mxu0 0.0
    %1259 = vmatprep.subr.mxu0 0.0
    %1260 = vmatpush1.xpose.msra.mxu0 0.0
    %1261 = vmatprep.subr.mxu0 0.0
    %1262 = vmatpush1.xpose.msra.mxu0 0.0
    %1263 = vmatprep.subr.mxu0 0.0
    %1264 = vmatpush1.xpose.msra.mxu0 0.0
    %1265 = vmatprep.subr.mxu0 0.0
    %1266 = vmatpush1.xpose.msra.mxu0 0.0
    %1267 = vmatprep.subr.mxu0 0.0
    %1268 = vmatpush1.xpose.msra.mxu0 0.0
    %1269 = vmatprep.subr.mxu0 0.0
    %1270 = vmatpush1.xpose.msra.mxu0 0.0
    %1271 = vmatprep.subr.mxu0 0.0
    %1272 = vmatpush1.xpose.msra.mxu0 0.0
    %1273 = vmatprep.subr.mxu0 0.0
    %1274 = vmatpush1.xpose.msra.mxu0 0.0
    %1275 = vmatprep.subr.mxu0 0.0
    %1276 = vmatpush1.xpose.msra.mxu0 0.0
    %1277 = vmatprep.subr.mxu0 0.0
    %1278 = vmatpush1.xpose.msra.mxu0 0.0
    %1279 = vmatprep.subr.mxu0 0.0
    %1280 = vmatpush1.xpose.msra.mxu0 0.0
    %1281 = vmatprep.subr.mxu0 0.0
    %1282 = vmatpush1.xpose.msra.mxu0 0.0
    %1283 = vmatprep.subr.mxu0 0.0
    %1284 = vmatpush1.xpose.msra.mxu0 0.0
    %1285 = vmatprep.subr.mxu0 0.0
    %1286 = vmatpush1.xpose.msra.mxu0 0.0
    %1287 = vmatprep.subr.mxu0 0.0
    %1288 = vmatpush1.xpose.msra.mxu0 0.0
    %1289 = vmatprep.subr.mxu0 0.0
    %1290 = vmatpush1.xpose.msra.mxu0 0.0
    %1291 = vmatprep.subr.mxu0 0.0
    %1292 = vmatpush1.xpose.msra.mxu0 0.0
    %1293 = vmatprep.subr.mxu0 0.0
    %1294 = vmatpush1.xpose.msra.mxu0 0.0
    %1295 = vmatprep.subr.mxu0 0.0
    %1296 = vmatpush1.xpose.msra.mxu0 0.0
    %1297 = vmatprep.subr.mxu0 0.0
    %1298 = vmatpush1.xpose.msra.mxu0 0.0
    %1299 = vmatprep.subr.mxu0 0.0
    %1300 = vmatpush1.xpose.msra.mxu0 0.0
    %1301 = vmatprep.subr.mxu0 0.0
    %1302 = vmatpush1.xpose.msra.mxu0 0.0
    %1303 = vmatprep.subr.mxu0 0.0
    %1304 = vmatpush1.xpose.msra.mxu0 0.0
    %1305 = vmatprep.subr.mxu0 0.0
    %1306 = vmatpush1.xpose.msra.mxu0 0.0
    %1307 = vmatprep.subr.mxu0 0.0
    %1308 = vmatpush1.xpose.msra.mxu0 0.0
    %1309 = vmatprep.mubr.f32.mxu0 0.0
    %1310 = vmatmul.mubr.f32.gmra.mrb[0].mxu0 %v1241
    %v1311 = vpop.f32.mrb[0].mxu0
    %v1312 = vadd.f32 0.0, %v1311
    %v1313 = vpop.f32.mrb[0].mxu0
    %1314 = vdwg.mxu0
    %v1315 = vsel %vm147, %v1234, -inf
    %1316 = vmax.xlane.f32.xlu0 %v1315
    %v1317 = vpop.xlane.xlu0 %1316
    %v1318 = vsel %vm147, %v1312, -inf
    %1319 = vmax.xlane.f32.xlu0 %v1318
    %v1320 = vpop.xlane.xlu0 %1319
    %v1321 = vsub.f32 %v1234, %v1317
    %v1322 = vsub.f32 %v1312, %v1320
    %v1323 = vmul.f32 %v1321, 1.442695
    %v1324 = vpow.pop %v1323
    %v1325 = vmul.f32 %v1322, 1.442695
    %v1326 = vpow.pop %v1325
    %v1327 = vsel %vm147, %v1324, 0.0
    %1328 = vadd.xlane.f32.xlu0 %v1327
    %v1329 = vpop.xlane.xlu0 %1328
    %v1330 = vsel %vm147, %v1326, 0.0
    %1331 = vadd.xlane.f32.xlu0 %v1330
    %v1332 = vpop.xlane.xlu0 %1331
    %v1333 = vrcp.pop %v1329
    %v1334 = vrcp.pop %v1332
    %v1335 = vmul.f32 %v1324, %v1333
    %v1336 = vmul.f32 %v1326, %v1334
    %1337 = vrot.lane.b32.xlu0 %v134, 40
    %v1338 = vpop.permute.xlu0 %1337
    %v1341 = vsel %vm147, %v1335, 0
    %1343 = vmatprep.subr.mxu0 0.0
    %1344 = vmatpush1.msra.mxu0 %v1338
    %1345 = vmatprep.subr.mxu0 0.0
    %1346 = vmatpush1.msra.mxu0 0.0
    %1347 = vmatprep.subr.mxu0 0.0
    %1348 = vmatpush1.msra.mxu0 0.0
    %1349 = vmatprep.subr.mxu0 0.0
    %1350 = vmatpush1.msra.mxu0 0.0
    %1351 = vmatprep.subr.mxu0 0.0
    %1352 = vmatpush1.msra.mxu0 0.0
    %1353 = vmatprep.subr.mxu0 0.0
    %1354 = vmatpush1.msra.mxu0 0.0
    %1355 = vmatprep.subr.mxu0 0.0
    %1356 = vmatpush1.msra.mxu0 0.0
    %1357 = vmatprep.subr.mxu0 0.0
    %1358 = vmatpush1.msra.mxu0 0.0
    %1359 = vmatprep.subr.mxu0 0.0
    %1360 = vmatpush1.msra.mxu0 0.0
    %1361 = vmatprep.subr.mxu0 0.0
    %1362 = vmatpush1.msra.mxu0 0.0
    %1363 = vmatprep.subr.mxu0 0.0
    %1364 = vmatpush1.msra.mxu0 0.0
    %1365 = vmatprep.subr.mxu0 0.0
    %1366 = vmatpush1.msra.mxu0 0.0
    %1367 = vmatprep.subr.mxu0 0.0
    %1368 = vmatpush1.msra.mxu0 0.0
    %1369 = vmatprep.subr.mxu0 0.0
    %1370 = vmatpush1.msra.mxu0 0.0
    %1371 = vmatprep.subr.mxu0 0.0
    %1372 = vmatpush1.msra.mxu0 0.0
    %1373 = vmatprep.subr.mxu0 0.0
    %1374 = vmatpush1.msra.mxu0 0.0
    %1375 = vmatprep.subr.mxu0 0.0
    %1376 = vmatpush1.msra.mxu0 0.0
    %1377 = vmatprep.subr.mxu0 0.0
    %1378 = vmatpush1.msra.mxu0 0.0
    %1379 = vmatprep.subr.mxu0 0.0
    %1380 = vmatpush1.msra.mxu0 0.0
    %1381 = vmatprep.subr.mxu0 0.0
    %1382 = vmatpush1.msra.mxu0 0.0
    %1383 = vmatprep.subr.mxu0 0.0
    %1384 = vmatpush1.msra.mxu0 0.0
    %1385 = vmatprep.subr.mxu0 0.0
    %1386 = vmatpush1.msra.mxu0 0.0
    %1387 = vmatprep.subr.mxu0 0.0
    %1388 = vmatpush1.msra.mxu0 0.0
    %1389 = vmatprep.subr.mxu0 0.0
    %1390 = vmatpush1.msra.mxu0 0.0
    %1391 = vmatprep.subr.mxu0 0.0
    %1392 = vmatpush1.msra.mxu0 0.0
    %1393 = vmatprep.subr.mxu0 0.0
    %1394 = vmatpush1.msra.mxu0 0.0
    %1395 = vmatprep.subr.mxu0 0.0
    %1396 = vmatpush1.msra.mxu0 0.0
    %1397 = vmatprep.subr.mxu0 0.0
    %1398 = vmatpush1.msra.mxu0 0.0
    %1399 = vmatprep.subr.mxu0 0.0
    %1400 = vmatpush1.msra.mxu0 0.0
    %1401 = vmatprep.subr.mxu0 0.0
    %1402 = vmatpush1.msra.mxu0 0.0
    %1403 = vmatprep.subr.mxu0 0.0
    %1404 = vmatpush1.msra.mxu0 0.0
    %1405 = vmatprep.subr.mxu0 0.0
    %1406 = vmatpush1.msra.mxu0 0.0
    %1407 = vmatprep.mubr.f32.mxu0 0.0
    %1408 = vmatmul.mubr.f32.gmra.mrb[0].mxu0 %v1341
    %v1409 = vpop.f32.mrb[0].mxu0
    %v1410 = vadd.f32 0.0, %v1409
    %v1411 = vpop.f32.mrb[0].mxu0
    %1412 = vdwg.mxu0
    %1413 = vrot.lane.b32.xlu0 %v139, 40
    %v1414 = vpop.permute.xlu0 %1413
    %v1417 = vsel %vm147, %v1336, 0
    %1419 = vmatprep.subr.mxu0 0.0
    %1420 = vmatpush1.msra.mxu0 %v1414
    %1421 = vmatprep.subr.mxu0 0.0
    %1422 = vmatpush1.msra.mxu0 0.0
    %1423 = vmatprep.subr.mxu0 0.0
    %1424 = vmatpush1.msra.mxu0 0.0
    %1425 = vmatprep.subr.mxu0 0.0
    %1426 = vmatpush1.msra.mxu0 0.0
    %1427 = vmatprep.subr.mxu0 0.0
    %1428 = vmatpush1.msra.mxu0 0.0
    %1429 = vmatprep.subr.mxu0 0.0
    %1430 = vmatpush1.msra.mxu0 0.0
    %1431 = vmatprep.subr.mxu0 0.0
    %1432 = vmatpush1.msra.mxu0 0.0
    %1433 = vmatprep.subr.mxu0 0.0
    %1434 = vmatpush1.msra.mxu0 0.0
    %1435 = vmatprep.subr.mxu0 0.0
    %1436 = vmatpush1.msra.mxu0 0.0
    %1437 = vmatprep.subr.mxu0 0.0
    %1438 = vmatpush1.msra.mxu0 0.0
    %1439 = vmatprep.subr.mxu0 0.0
    %1440 = vmatpush1.msra.mxu0 0.0
    %1441 = vmatprep.subr.mxu0 0.0
    %1442 = vmatpush1.msra.mxu0 0.0
    %1443 = vmatprep.subr.mxu0 0.0
    %1444 = vmatpush1.msra.mxu0 0.0
    %1445 = vmatprep.subr.mxu0 0.0
    %1446 = vmatpush1.msra.mxu0 0.0
    %1447 = vmatprep.subr.mxu0 0.0
    %1448 = vmatpush1.msra.mxu0 0.0
    %1449 = vmatprep.subr.mxu0 0.0
    %1450 = vmatpush1.msra.mxu0 0.0
    %1451 = vmatprep.subr.mxu0 0.0
    %1452 = vmatpush1.msra.mxu0 0.0
    %1453 = vmatprep.subr.mxu0 0.0
    %1454 = vmatpush1.msra.mxu0 0.0
    %1455 = vmatprep.subr.mxu0 0.0
    %1456 = vmatpush1.msra.mxu0 0.0
    %1457 = vmatprep.subr.mxu0 0.0
    %1458 = vmatpush1.msra.mxu0 0.0
    %1459 = vmatprep.subr.mxu0 0.0
    %1460 = vmatpush1.msra.mxu0 0.0
    %1461 = vmatprep.subr.mxu0 0.0
    %1462 = vmatpush1.msra.mxu0 0.0
    %1463 = vmatprep.subr.mxu0 0.0
    %1464 = vmatpush1.msra.mxu0 0.0
    %1465 = vmatprep.subr.mxu0 0.0
    %1466 = vmatpush1.msra.mxu0 0.0
    %1467 = vmatprep.subr.mxu0 0.0
    %1468 = vmatpush1.msra.mxu0 0.0
    %1469 = vmatprep.subr.mxu0 0.0
    %1470 = vmatpush1.msra.mxu0 0.0
    %1471 = vmatprep.subr.mxu0 0.0
    %1472 = vmatpush1.msra.mxu0 0.0
    %1473 = vmatprep.subr.mxu0 0.0
    %1474 = vmatpush1.msra.mxu0 0.0
    %1475 = vmatprep.subr.mxu0 0.0
    %1476 = vmatpush1.msra.mxu0 0.0
    %1477 = vmatprep.subr.mxu0 0.0
    %1478 = vmatpush1.msra.mxu0 0.0
    %1479 = vmatprep.subr.mxu0 0.0
    %1480 = vmatpush1.msra.mxu0 0.0
    %1481 = vmatprep.subr.mxu0 0.0
    %1482 = vmatpush1.msra.mxu0 0.0
    %1483 = vmatprep.mubr.f32.mxu0 0.0
    %1484 = vmatmul.mubr.f32.gmra.mrb[0].mxu0 %v1417
    %v1485 = vpop.f32.mrb[0].mxu0
    %v1486 = vadd.f32 0.0, %v1485
    %v1487 = vpop.f32.mrb[0].mxu0
    %1488 = vdwg.mxu0
    %1491 = vrot.lane.b32.xlu0 %v1410, 24
    %v1492 = vpop.permute.xlu0 %1491
    %1493 = vrot.lane.b32.xlu0 %v1486, 24
    %v1494 = vpop.permute.xlu0 %1493
    %vm1497 = vcmask 261312
    %1498 = vst.msk [vmem:[#allocation2] sm:$0xff] %vm1497, %v1492
    %1499 = vst.msk [vmem:[#allocation2 + $0x8] sm:$0xff] %vm1497, %v1494
    %v1500 = vld [vmem:[#allocation2] sm:$0xff]
    %v1501 = vld [vmem:[#allocation2 + $0x8] sm:$0xff]
    %v1502 = vld [vmem:[%s3] sm:$0xff]
    %v1503 = vld [vmem:[%s3 + $0x8] sm:$0xff]
    %v1504 = vld [vmem:[%s3 + $0x10] sm:$0xff]
    %v1505 = vld [vmem:[%s3 + $0x18] sm:$0xff]
    %v1507 = vsel %vm33, %v1500, 0
    %v1510 = vsel %vm33, %v1501, 0
    %1512 = vmatprep.subr.mxu0 0.0
    %1513 = vmatpush1.msra.mxu0 %v1502
    %1514 = vmatprep.subr.mxu0 0.0
    %1515 = vmatpush1.msra.mxu0 %v1503
    %1516 = vmatprep.subr.mxu0 0.0
    %1517 = vmatpush1.msra.mxu0 %v1504
    %1518 = vmatprep.subr.mxu0 0.0
    %1519 = vmatpush1.msra.mxu0 %v1505
    %1520 = vmatprep.subr.mxu0 0.0
    %1521 = vmatpush1.msra.mxu0 0.0
    %1522 = vmatprep.subr.mxu0 0.0
    %1523 = vmatpush1.msra.mxu0 0.0
    %1524 = vmatprep.subr.mxu0 0.0
    %1525 = vmatpush1.msra.mxu0 0.0
    %1526 = vmatprep.subr.mxu0 0.0
    %1527 = vmatpush1.msra.mxu0 0.0
    %1528 = vmatprep.subr.mxu0 0.0
    %1529 = vmatpush1.msra.mxu0 0.0
    %1530 = vmatprep.subr.mxu0 0.0
    %1531 = vmatpush1.msra.mxu0 0.0
    %1532 = vmatprep.subr.mxu0 0.0
    %1533 = vmatpush1.msra.mxu0 0.0
    %1534 = vmatprep.subr.mxu0 0.0
    %1535 = vmatpush1.msra.mxu0 0.0
    %1536 = vmatprep.subr.mxu0 0.0
    %1537 = vmatpush1.msra.mxu0 0.0
    %1538 = vmatprep.subr.mxu0 0.0
    %1539 = vmatpush1.msra.mxu0 0.0
    %1540 = vmatprep.subr.mxu0 0.0
    %1541 = vmatpush1.msra.mxu0 0.0
    %1542 = vmatprep.subr.mxu0 0.0
    %1543 = vmatpush1.msra.mxu0 0.0
    %1544 = vmatprep.subr.mxu0 0.0
    %1545 = vmatpush1.msra.mxu0 0.0
    %1546 = vmatprep.subr.mxu0 0.0
    %1547 = vmatpush1.msra.mxu0 0.0
    %1548 = vmatprep.subr.mxu0 0.0
    %1549 = vmatpush1.msra.mxu0 0.0
    %1550 = vmatprep.subr.mxu0 0.0
    %1551 = vmatpush1.msra.mxu0 0.0
    %1552 = vmatprep.subr.mxu0 0.0
    %1553 = vmatpush1.msra.mxu0 0.0
    %1554 = vmatprep.subr.mxu0 0.0
    %1555 = vmatpush1.msra.mxu0 0.0
    %1556 = vmatprep.subr.mxu0 0.0
    %1557 = vmatpush1.msra.mxu0 0.0
    %1558 = vmatprep.subr.mxu0 0.0
    %1559 = vmatpush1.msra.mxu0 0.0
    %1560 = vmatprep.subr.mxu0 0.0
    %1561 = vmatpush1.msra.mxu0 0.0
    %1562 = vmatprep.subr.mxu0 0.0
    %1563 = vmatpush1.msra.mxu0 0.0
    %1564 = vmatprep.subr.mxu0 0.0
    %1565 = vmatpush1.msra.mxu0 0.0
    %1566 = vmatprep.subr.mxu0 0.0
    %1567 = vmatpush1.msra.mxu0 0.0
    %1568 = vmatprep.subr.mxu0 0.0
    %1569 = vmatpush1.msra.mxu0 0.0
    %1570 = vmatprep.subr.mxu0 0.0
    %1571 = vmatpush1.msra.mxu0 0.0
    %1572 = vmatprep.subr.mxu0 0.0
    %1573 = vmatpush1.msra.mxu0 0.0
    %1574 = vmatprep.subr.mxu0 0.0
    %1575 = vmatpush1.msra.mxu0 0.0
    %1576 = vmatprep.mubr.f32.mxu0 0.0
    %1577 = vmatmul.mubr.f32.gmra.mrb[0].mxu0 %v1507
    %v1578 = vpop.f32.mrb[0].mxu0
    %v1579 = vadd.f32 0.0, %v1578
    %v1580 = vpop.f32.mrb[0].mxu0
    %1581 = vmatprep.mubr.f32.mxu0 0.0
    %1582 = vmatmul.mubr.f32.gmra.mrb[0].mxu0 %v1510
    %v1583 = vpop.f32.mrb[0].mxu0
    %v1584 = vadd.f32 0.0, %v1583
    %v1585 = vpop.f32.mrb[0].mxu0
    %1586 = vdwg.mxu0
    %v1587 = vadd.f32 %v27, %v1579
    %v1588 = vadd.f32 %v28, %v1584
    %v1589 = vmul.f32 %v1587, %v1587
    %v1590 = vmul.f32 %v1588, %v1588
    %v1591 = vsel %vm33, %v1589, 0.0
    %1592 = vadd.xlane.f32.xlu0 %v1591
    %v1593 = vpop.xlane.xlu0 %1592
    %v1594 = vsel %vm33, %v1590, 0.0
    %1595 = vadd.xlane.f32.xlu0 %v1594
    %v1596 = vpop.xlane.xlu0 %1595
    %v1597 = vmul.f32 %v1593, %v40
    %v1598 = vmul.f32 %v1596, %v40
    %v1599 = vadd.f32 %v1597, 1e-06
    %v1600 = vadd.f32 %v1598, 1e-06
    %v1601 = vrsqrt.pop %v1599
    %v1602 = vrsqrt.pop %v1600
    %v1603 = vmul.f32 %v1587, %v1601
    %v1604 = vmul.f32 %v1588, %v1602
    %v1606 = vlaneseq
    %v1607 = vshrl.u32 %v1606, 7
    %v1608 = vsub.s32 0, %v1607
    %v1609 = vrot.slane %v30, %v1608
    %v1611 = vmul.f32 %v1603, %v1609
    %v1612 = vmul.f32 %v1604, %v1609
    %v1613 = vld [vmem:[%s5] sm:$0xff]
    %v1614 = vld [vmem:[%s5 + $0x8] sm:$0xff]
    %v1615 = vld [vmem:[%s5 + $0x10] sm:$0xff]
    %v1616 = vld [vmem:[%s5 + $0x18] sm:$0xff]
    %v1617 = vld [vmem:[%s5 + $0x20] sm:$0xff]
    %v1618 = vld [vmem:[%s5 + $0x28] sm:$0xff]
    %v1619 = vld [vmem:[%s5 + $0x30] sm:$0xff]
    %v1620 = vld [vmem:[%s5 + $0x38] sm:$0xff]
    %v1622 = vsel %vm33, %v1611, 0
    %v1625 = vsel %vm33, %v1612, 0
    %1627 = vmatprep.subr.mxu0 %v1614
    %1628 = vmatpush1.msra.mxu0 %v1613
    %1629 = vmatprep.subr.mxu0 %v1616
    %1630 = vmatpush1.msra.mxu0 %v1615
    %1631 = vmatprep.subr.mxu0 %v1618
    %1632 = vmatpush1.msra.mxu0 %v1617
    %1633 = vmatprep.subr.mxu0 %v1620
    %1634 = vmatpush1.msra.mxu0 %v1619
    %1635 = vmatprep.subr.mxu0 0.0
    %1636 = vmatpush1.msra.mxu0 0.0
    %1637 = vmatprep.subr.mxu0 0.0
    %1638 = vmatpush1.msra.mxu0 0.0
    %1639 = vmatprep.subr.mxu0 0.0
    %1640 = vmatpush1.msra.mxu0 0.0
    %1641 = vmatprep.subr.mxu0 0.0
    %1642 = vmatpush1.msra.mxu0 0.0
    %1643 = vmatprep.subr.mxu0 0.0
    %1644 = vmatpush1.msra.mxu0 0.0
    %1645 = vmatprep.subr.mxu0 0.0
    %1646 = vmatpush1.msra.mxu0 0.0
    %1647 = vmatprep.subr.mxu0 0.0
    %1648 = vmatpush1.msra.mxu0 0.0
    %1649 = vmatprep.subr.mxu0 0.0
    %1650 = vmatpush1.msra.mxu0 0.0
    %1651 = vmatprep.subr.mxu0 0.0
    %1652 = vmatpush1.msra.mxu0 0.0
    %1653 = vmatprep.subr.mxu0 0.0
    %1654 = vmatpush1.msra.mxu0 0.0
    %1655 = vmatprep.subr.mxu0 0.0
    %1656 = vmatpush1.msra.mxu0 0.0
    %1657 = vmatprep.subr.mxu0 0.0
    %1658 = vmatpush1.msra.mxu0 0.0
    %1659 = vmatprep.subr.mxu0 0.0
    %1660 = vmatpush1.msra.mxu0 0.0
    %1661 = vmatprep.subr.mxu0 0.0
    %1662 = vmatpush1.msra.mxu0 0.0
    %1663 = vmatprep.subr.mxu0 0.0
    %1664 = vmatpush1.msra.mxu0 0.0
    %1665 = vmatprep.subr.mxu0 0.0
    %1666 = vmatpush1.msra.mxu0 0.0
    %1667 = vmatprep.subr.mxu0 0.0
    %1668 = vmatpush1.msra.mxu0 0.0
    %1669 = vmatprep.subr.mxu0 0.0
    %1670 = vmatpush1.msra.mxu0 0.0
    %1671 = vmatprep.subr.mxu0 0.0
    %1672 = vmatpush1.msra.mxu0 0.0
    %1673 = vmatprep.subr.mxu0 0.0
    %1674 = vmatpush1.msra.mxu0 0.0
    %1675 = vmatprep.subr.mxu0 0.0
    %1676 = vmatpush1.msra.mxu0 0.0
    %1677 = vmatprep.subr.mxu0 0.0
    %1678 = vmatpush1.msra.mxu0 0.0
    %1679 = vmatprep.subr.mxu0 0.0
    %1680 = vmatpush1.msra.mxu0 0.0
    %1681 = vmatprep.subr.mxu0 0.0
    %1682 = vmatpush1.msra.mxu0 0.0
    %1683 = vmatprep.subr.mxu0 0.0
    %1684 = vmatpush1.msra.mxu0 0.0
    %1685 = vmatprep.subr.mxu0 0.0
    %1686 = vmatpush1.msra.mxu0 0.0
    %1687 = vmatprep.subr.mxu0 0.0
    %1688 = vmatpush1.msra.mxu0 0.0
    %1689 = vmatprep.subr.mxu0 0.0
    %1690 = vmatpush1.msra.mxu0 0.0
    %1691 = vmatprep.mubr.f32.mxu0 0.0
    %1692 = vmatmul.mubr.f32.gmra.mrb[0].mxu0 %v1622
    %v1693 = vpop.f32.mrb[0].mxu0
    %v1694 = vadd.f32 0.0, %v1693
    %v1695 = vpop.f32.mrb[0].mxu0
    %v1696 = vadd.f32 0.0, %v1695
    %1697 = vmatprep.mubr.f32.mxu0 0.0
    %1698 = vmatmul.mubr.f32.gmra.mrb[0].mxu0 %v1625
    %v1699 = vpop.f32.mrb[0].mxu0
    %v1700 = vadd.f32 0.0, %v1699
    %v1701 = vpop.f32.mrb[0].mxu0
    %v1702 = vadd.f32 0.0, %v1701
    %1703 = vdwg.mxu0
    %v1704 = vxor.u32 %v1694, 2147483648
    %v1705 = vxor.u32 %v1700, 2147483648
    %v1706 = vmul.f32 %v1704, 1.442695
    %v1707 = vpow.pop %v1706
    %v1708 = vmul.f32 %v1705, 1.442695
    %v1709 = vpow.pop %v1708
    %v1710 = vadd.f32 %v1707, 1.0
    %v1711 = vadd.f32 %v1709, 1.0
    %v1712 = vrcp.pop %v1710
    %v1713 = vmul.f32 1.0, %v1712
    %v1714 = vrcp.pop %v1711
    %v1715 = vmul.f32 1.0, %v1714
    %v1716 = vmul.f32 %v1694, %v1713
    %v1717 = vmul.f32 %v1700, %v1715
    %v1718 = vmul.f32 %v1716, %v1696
    %v1719 = vmul.f32 %v1717, %v1702
    %v1720 = vld [vmem:[%s6] sm:$0xff]
    %v1721 = vld [vmem:[%s6 + $0x8] sm:$0xff]
    %v1722 = vld [vmem:[%s6 + $0x10] sm:$0xff]
    %v1723 = vld [vmem:[%s6 + $0x18] sm:$0xff]
    %v1724 = vld [vmem:[%s6 + $0x20] sm:$0xff]
    %v1725 = vld [vmem:[%s6 + $0x28] sm:$0xff]
    %v1726 = vld [vmem:[%s6 + $0x30] sm:$0xff]
    %v1727 = vld [vmem:[%s6 + $0x38] sm:$0xff]
    %v1728 = vld [vmem:[%s6 + $0x40] sm:$0xff]
    %v1729 = vld [vmem:[%s6 + $0x48] sm:$0xff]
    %v1730 = vld [vmem:[%s6 + $0x50] sm:$0xff]
    %v1731 = vld [vmem:[%s6 + $0x58] sm:$0xff]
    %v1732 = vld [vmem:[%s6 + $0x60] sm:$0xff]
    %v1733 = vld [vmem:[%s6 + $0x68] sm:$0xff]
    %v1734 = vld [vmem:[%s6 + $0x70] sm:$0xff]
    %v1735 = vld [vmem:[%s6 + $0x78] sm:$0xff]
    %1736 = vmatprep.subr.mxu0 0.0
    %1737 = vmatpush1.msra.mxu0 %v1720
    %1738 = vmatprep.subr.mxu0 0.0
    %1739 = vmatpush1.msra.mxu0 %v1721
    %1740 = vmatprep.subr.mxu0 0.0
    %1741 = vmatpush1.msra.mxu0 %v1722
    %1742 = vmatprep.subr.mxu0 0.0
    %1743 = vmatpush1.msra.mxu0 %v1723
    %1744 = vmatprep.subr.mxu0 0.0
    %1745 = vmatpush1.msra.mxu0 %v1724
    %1746 = vmatprep.subr.mxu0 0.0
    %1747 = vmatpush1.msra.mxu0 %v1725
    %1748 = vmatprep.subr.mxu0 0.0
    %1749 = vmatpush1.msra.mxu0 %v1726
    %1750 = vmatprep.subr.mxu0 0.0
    %1751 = vmatpush1.msra.mxu0 %v1727
    %1752 = vmatprep.subr.mxu0 0.0
    %1753 = vmatpush1.msra.mxu0 %v1728
    %1754 = vmatprep.subr.mxu0 0.0
    %1755 = vmatpush1.msra.mxu0 %v1729
    %1756 = vmatprep.subr.mxu0 0.0
    %1757 = vmatpush1.msra.mxu0 %v1730
    %1758 = vmatprep.subr.mxu0 0.0
    %1759 = vmatpush1.msra.mxu0 %v1731
    %1760 = vmatprep.subr.mxu0 0.0
    %1761 = vmatpush1.msra.mxu0 %v1732
    %1762 = vmatprep.subr.mxu0 0.0
    %1763 = vmatpush1.msra.mxu0 %v1733
    %1764 = vmatprep.subr.mxu0 0.0
    %1765 = vmatpush1.msra.mxu0 %v1734
    %1766 = vmatprep.subr.mxu0 0.0
    %1767 = vmatpush1.msra.mxu0 %v1735
    %1768 = vmatprep.subr.mxu0 0.0
    %1769 = vmatpush1.msra.mxu0 0.0
    %1770 = vmatprep.subr.mxu0 0.0
    %1771 = vmatpush1.msra.mxu0 0.0
    %1772 = vmatprep.subr.mxu0 0.0
    %1773 = vmatpush1.msra.mxu0 0.0
    %1774 = vmatprep.subr.mxu0 0.0
    %1775 = vmatpush1.msra.mxu0 0.0
    %1776 = vmatprep.subr.mxu0 0.0
    %1777 = vmatpush1.msra.mxu0 0.0
    %1778 = vmatprep.subr.mxu0 0.0
    %1779 = vmatpush1.msra.mxu0 0.0
    %1780 = vmatprep.subr.mxu0 0.0
    %1781 = vmatpush1.msra.mxu0 0.0
    %1782 = vmatprep.subr.mxu0 0.0
    %1783 = vmatpush1.msra.mxu0 0.0
    %1784 = vmatprep.subr.mxu0 0.0
    %1785 = vmatpush1.msra.mxu0 0.0
    %1786 = vmatprep.subr.mxu0 0.0
    %1787 = vmatpush1.msra.mxu0 0.0
    %1788 = vmatprep.subr.mxu0 0.0
    %1789 = vmatpush1.msra.mxu0 0.0
    %1790 = vmatprep.subr.mxu0 0.0
    %1791 = vmatpush1.msra.mxu0 0.0
    %1792 = vmatprep.subr.mxu0 0.0
    %1793 = vmatpush1.msra.mxu0 0.0
    %1794 = vmatprep.subr.mxu0 0.0
    %1795 = vmatpush1.msra.mxu0 0.0
    %1796 = vmatprep.subr.mxu0 0.0
    %1797 = vmatpush1.msra.mxu0 0.0
    %1798 = vmatprep.subr.mxu0 0.0
    %1799 = vmatpush1.msra.mxu0 0.0
    %1800 = vmatprep.mubr.f32.mxu0 0.0
    %1801 = vmatmul.mubr.f32.gmra.mrb[0].mxu0 %v1718
    %v1802 = vpop.f32.mrb[0].mxu0
    %v1803 = vadd.f32 0.0, %v1802
    %v1804 = vpop.f32.mrb[0].mxu0
    %1805 = vmatprep.mubr.f32.mxu0 0.0
    %1806 = vmatmul.mubr.f32.gmra.mrb[0].mxu0 %v1719
    %v1807 = vpop.f32.mrb[0].mxu0
    %v1808 = vadd.f32 0.0, %v1807
    %v1809 = vpop.f32.mrb[0].mxu0
    %1810 = vdwg.mxu0
    %v1811 = vadd.f32 %v1587, %v1803
    %v1812 = vadd.f32 %v1588, %v1808
    %1813 = vst.msk [vmem:[#allocation3] sm:$0xff] %vm33, %v1811
    %1814 = vst.msk [vmem:[#allocation3 + $0x8] sm:$0xff] %vm33, %v1812
    // Predicated region
    $region30: #{tpu_custom_call.1} parent=1 // pred_check
      _
    $region31: #{tpu_custom_call.1} parent=1 // pred_check_branch
      %1816 = sbr.rel (0) target = $region33
    $region32: #{tpu_custom_call.1} parent=1 // pred_region
      %s1818 = ssub.s32 256, 256
      %1819 = vsyncadd [#allocation4], %s1818
      %s1820 = sshll.u32 [#allocation3], 4
      %s1821 = int_to_ptr.vmem [resolvable:$true] %s1820
      %1826 = dma.vmem_to_hbm [thread:$0]  %s1821, 256, %s7, [#allocation4], 128, 128, 8
    $region33: #{tpu_custom_call.1} parent=1 // pred_fallthru
      _
    // Predicated region
    $region34: #{tpu_custom_call.1} parent=1 // pred_check
      _
    $region35: #{tpu_custom_call.1} parent=1 // pred_check_branch
      %1828 = sbr.rel (0) target = $region37
    $region36: #{tpu_custom_call.1} parent=1 // pred_region
      %1829 = dma.done [#allocation4], 256
    $region37: #{tpu_custom_call.1} parent=1 // pred_fallthru
      _
    %1830 = vsyncpa [#allocation4], 1

</llo_original>
